<compile_context>
chip_gen: v7x
topology: tpu7x:2x2x1
jax: 0.10.0
libtpu: 0.0.40
codegen_flags: <defaults>
</compile_context>

<pallas_src>
import jax
import jax.numpy as jnp
from jax.experimental import pallas as pl
from jax.experimental.pallas import tpu as pltpu

H1, H2, H3 = 256, 512, 512
LANES = 128          # lane width for the padded final layer
NEG_BIG = -1e30      # padded-logit bias -> exp() underflows to 0 under softmax


def _round_up(x, m):
    return (x + m - 1) // m * m


def actor_kernel(x_ref, w1_ref, b1_ref, w2_ref, b2_ref,
                 w3_ref, b3_ref, w4_ref, b4_ref, o_ref):
    # fc1 + relu   (bf16 into MXU, f32 accumulate, f32 elementwise)
    h = jnp.dot(x_ref[...], w1_ref[...], preferred_element_type=jnp.float32)
    h = jnp.maximum(h + b1_ref[...], 0.0)
    # fc2 + relu
    h = jnp.dot(h.astype(jnp.bfloat16), w2_ref[...],
                preferred_element_type=jnp.float32)
    h = jnp.maximum(h + b2_ref[...], 0.0)
    # fc3 + relu
    h = jnp.dot(h.astype(jnp.bfloat16), w3_ref[...],
                preferred_element_type=jnp.float32)
    h = jnp.maximum(h + b3_ref[...], 0.0)
    # fc4 (padded to 128 lanes; padded lanes carry bias -1e30)
    logits = jnp.dot(h.astype(jnp.bfloat16), w4_ref[...],
                     preferred_element_type=jnp.float32) + b4_ref[...]
    # softmax over the lane axis (padded lanes contribute exp(~-inf) = 0)
    m = jnp.max(logits, axis=-1, keepdims=True)
    e = jnp.exp(logits - m)
    s = jnp.sum(e, axis=-1, keepdims=True)
    o_ref[...] = e / s


def prepare_params(params, num_actions):
    """One-time parameter preparation (hoisted out of the forward hot path)."""
    (w1, b1), (w2, b2), (w3, b3), (w4, b4) = params
    out_pad = _round_up(num_actions, LANES)
    w4p = jnp.zeros((H3, out_pad), jnp.float32).at[:, :num_actions].set(w4)
    b4p = jnp.full((1, out_pad), NEG_BIG, jnp.float32).at[:, :num_actions].set(
        b4.reshape(1, -1))
    return {
        "w1": w1.astype(jnp.bfloat16), "b1": b1.reshape(1, -1).astype(jnp.float32),
        "w2": w2.astype(jnp.bfloat16), "b2": b2.reshape(1, -1).astype(jnp.float32),
        "w3": w3.astype(jnp.bfloat16), "b3": b3.reshape(1, -1).astype(jnp.float32),
        "w4": w4p.astype(jnp.bfloat16), "b4": b4p,
        "num_actions": num_actions,
    }


def actor_forward(x, prepared):
    """x: (B, num_states) f32. Returns softmax probabilities (B, num_actions) f32."""
    B, num_states = x.shape
    num_actions = prepared["num_actions"]
    out_pad = prepared["w4"].shape[1]

    # Batch tile: multiple of 8 (sublane constraint), capped at 256 (MXU rows).
    TB = min(256, _round_up(B, 8))
    Bp = _round_up(B, TB)
    xp = x if Bp == B else jnp.pad(x, ((0, Bp - B), (0, 0)))
    xp = xp.astype(jnp.bfloat16)

    # Weights / biases: constant index map -> VMEM-resident across grid steps.
    const = lambda *shape: pl.BlockSpec(shape, lambda i: tuple(0 for _ in shape))

    out = pl.pallas_call(
        actor_kernel,
        out_shape=jax.ShapeDtypeStruct((Bp, out_pad), jnp.float32),
        grid_spec=pltpu.PrefetchScalarGridSpec(
            num_scalar_prefetch=0,
            grid=(Bp // TB,),
            in_specs=[
                pl.BlockSpec((TB, num_states), lambda i: (i, 0)),   # x: batch-tiled
                const(num_states, H1), const(1, H1),
                const(H1, H2), const(1, H2),
                const(H2, H3), const(1, H3),
                const(H3, out_pad), const(1, out_pad),
            ],
            out_specs=pl.BlockSpec((TB, out_pad), lambda i: (i, 0)),
        ),
        compiler_params=pltpu.CompilerParams(
            dimension_semantics=("parallel",)),  # megacore-shardable batch axis
    )(xp, prepared["w1"], prepared["b1"], prepared["w2"], prepared["b2"],
      prepared["w3"], prepared["b3"], prepared["w4"], prepared["b4"])

    return out[:B, :num_actions]


def init_linear(key, fan_in, fan_out):
    """Deterministic torch.nn.Linear-style init: U(-1/sqrt(fan_in), 1/sqrt(fan_in))."""
    kw, kb = jax.random.split(key)
    bound = 1.0 / jnp.sqrt(jnp.float32(fan_in))
    w = jax.random.uniform(kw, (fan_in, fan_out), jnp.float32, -bound, bound)
    b = jax.random.uniform(kb, (fan_out,), jnp.float32, -bound, bound)
    return w, b


def make_params(key, num_states, num_actions):
    k1, k2, k3, k4 = jax.random.split(key, 4)
    return (
        init_linear(k1, num_states, H1),
        init_linear(k2, H1, H2),
        init_linear(k3, H2, H3),
        init_linear(k4, H3, num_actions),
    )


def reference_forward(x, params):
    (w1, b1), (w2, b2), (w3, b3), (w4, b4) = params
    h = jnp.maximum(x @ w1 + b1, 0.0)
    h = jnp.maximum(h @ w2 + b2, 0.0)
    h = jnp.maximum(h @ w3 + b3, 0.0)
    return jax.nn.softmax(h @ w4 + b4, axis=-1)


if __name__ == "__main__":
    key = jax.random.PRNGKey(0)
    kx, kp = jax.random.split(key)

    B, num_states, num_actions = 8, 32, 4
    x = jax.random.normal(kx, (B, num_states), jnp.float32)
    params = make_params(kp, num_states, num_actions)
    prepared = prepare_params(params, num_actions)

    y = actor_forward(x, prepared)
    y = jax.block_until_ready(y)

    y_ref = reference_forward(x, params)
    assert y.shape == (B, num_actions)
    assert bool(jnp.all(jnp.isfinite(y)))
    # rows are valid probability distributions
    assert bool(jnp.allclose(jnp.sum(y, axis=-1), 1.0, atol=1e-3))
    # bf16 weights/activations with f32 accumulation vs f32 reference
    assert float(jnp.max(jnp.abs(y - y_ref))) < 2e-2

    print("KERNEL_OK")
</pallas_src>

<mosaic_0001>
module attributes {stable_mosaic.version = 11 : i64} {
  func.func @actor_kernel(%arg0: i32, %arg1: memref<8x32xbf16, #tpu.memory_space<vmem>>, %arg2: memref<32x256xbf16, #tpu.memory_space<vmem>>, %arg3: memref<1x256xf32, #tpu.memory_space<vmem>>, %arg4: memref<256x512xbf16, #tpu.memory_space<vmem>>, %arg5: memref<1x512xf32, #tpu.memory_space<vmem>>, %arg6: memref<512x512xbf16, #tpu.memory_space<vmem>>, %arg7: memref<1x512xf32, #tpu.memory_space<vmem>>, %arg8: memref<512x128xbf16, #tpu.memory_space<vmem>>, %arg9: memref<1x128xf32, #tpu.memory_space<vmem>>, %arg10: memref<8x128xf32, #tpu.memory_space<vmem>>) attributes {dimension_semantics = [#tpu.dimension_semantics<parallel>], iteration_bounds = array<i64: 1>, scalar_prefetch = 0 : i64, scratch_operands = 0 : i64, tpu.core_type = #tpu.core_type<tc>, window_params = [{transform_indices = @transform_0, window_bounds = array<i64: 8, 32>}, {pipeline_mode = #tpu.pipeline_mode<synchronous>, transform_indices = @transform_1, window_bounds = array<i64: 32, 256>}, {pipeline_mode = #tpu.pipeline_mode<synchronous>, transform_indices = @transform_2, window_bounds = array<i64: 1, 256>}, {pipeline_mode = #tpu.pipeline_mode<synchronous>, transform_indices = @transform_3, window_bounds = array<i64: 256, 512>}, {pipeline_mode = #tpu.pipeline_mode<synchronous>, transform_indices = @transform_4, window_bounds = array<i64: 1, 512>}, {pipeline_mode = #tpu.pipeline_mode<synchronous>, transform_indices = @transform_5, window_bounds = array<i64: 512, 512>}, {pipeline_mode = #tpu.pipeline_mode<synchronous>, transform_indices = @transform_6, window_bounds = array<i64: 1, 512>}, {pipeline_mode = #tpu.pipeline_mode<synchronous>, transform_indices = @transform_7, window_bounds = array<i64: 512, 128>}, {pipeline_mode = #tpu.pipeline_mode<synchronous>, transform_indices = @transform_8, window_bounds = array<i64: 1, 128>}, {transform_indices = @transform_9, window_bounds = array<i64: 8, 128>}]} {
    %c0 = arith.constant 0 : index
    %c0_0 = arith.constant 0 : index
    %0 = vector.load %arg1[%c0, %c0_0] : memref<8x32xbf16, #tpu.memory_space<vmem>>, vector<8x32xbf16>
    %c0_1 = arith.constant 0 : index
    %c0_2 = arith.constant 0 : index
    %1 = vector.load %arg2[%c0_1, %c0_2] : memref<32x256xbf16, #tpu.memory_space<vmem>>, vector<32x256xbf16>
    %cst = arith.constant dense<0.000000e+00> : vector<8x256xf32>
    %2 = tpu.matmul %0, %1, %cst {dimension_numbers = #tpu.dot_dimension_numbers<[1], [0], [0], [1], [0, 0, 1, 1], [], []>} : vector<8x32xbf16>, vector<32x256xbf16>, vector<8x256xf32> -> vector<8x256xf32>
    %c0_3 = arith.constant 0 : index
    %c0_4 = arith.constant 0 : index
    %3 = vector.load %arg3[%c0_3, %c0_4] : memref<1x256xf32, #tpu.memory_space<vmem>>, vector<1x256xf32>
    %4 = vector.broadcast %3 : vector<1x256xf32> to vector<8x256xf32>
    %5 = arith.addf %2, %4 : vector<8x256xf32>
    %cst_5 = arith.constant 0.000000e+00 : f32
    %6 = vector.broadcast %cst_5 : f32 to vector<8x256xf32>
    %7 = arith.maximumf %5, %6 : vector<8x256xf32>
    %8 = arith.truncf %7 : vector<8x256xf32> to vector<8x256xbf16>
    %c0_6 = arith.constant 0 : index
    %c0_7 = arith.constant 0 : index
    %9 = vector.load %arg4[%c0_6, %c0_7] : memref<256x512xbf16, #tpu.memory_space<vmem>>, vector<256x512xbf16>
    %cst_8 = arith.constant dense<0.000000e+00> : vector<8x512xf32>
    %10 = tpu.matmul %8, %9, %cst_8 {dimension_numbers = #tpu.dot_dimension_numbers<[1], [0], [0], [1], [0, 0, 1, 1], [], []>} : vector<8x256xbf16>, vector<256x512xbf16>, vector<8x512xf32> -> vector<8x512xf32>
    %c0_9 = arith.constant 0 : index
    %c0_10 = arith.constant 0 : index
    %11 = vector.load %arg5[%c0_9, %c0_10] : memref<1x512xf32, #tpu.memory_space<vmem>>, vector<1x512xf32>
    %12 = vector.broadcast %11 : vector<1x512xf32> to vector<8x512xf32>
    %13 = arith.addf %10, %12 : vector<8x512xf32>
    %cst_11 = arith.constant 0.000000e+00 : f32
    %14 = vector.broadcast %cst_11 : f32 to vector<8x512xf32>
    %15 = arith.maximumf %13, %14 : vector<8x512xf32>
    %16 = arith.truncf %15 : vector<8x512xf32> to vector<8x512xbf16>
    %c0_12 = arith.constant 0 : index
    %c0_13 = arith.constant 0 : index
    %17 = vector.load %arg6[%c0_12, %c0_13] : memref<512x512xbf16, #tpu.memory_space<vmem>>, vector<512x512xbf16>
    %cst_14 = arith.constant dense<0.000000e+00> : vector<8x512xf32>
    %18 = tpu.matmul %16, %17, %cst_14 {dimension_numbers = #tpu.dot_dimension_numbers<[1], [0], [0], [1], [0, 0, 1, 1], [], []>} : vector<8x512xbf16>, vector<512x512xbf16>, vector<8x512xf32> -> vector<8x512xf32>
    %c0_15 = arith.constant 0 : index
    %c0_16 = arith.constant 0 : index
    %19 = vector.load %arg7[%c0_15, %c0_16] : memref<1x512xf32, #tpu.memory_space<vmem>>, vector<1x512xf32>
    %20 = vector.broadcast %19 : vector<1x512xf32> to vector<8x512xf32>
    %21 = arith.addf %18, %20 : vector<8x512xf32>
    %cst_17 = arith.constant 0.000000e+00 : f32
    %22 = vector.broadcast %cst_17 : f32 to vector<8x512xf32>
    %23 = arith.maximumf %21, %22 : vector<8x512xf32>
    %24 = arith.truncf %23 : vector<8x512xf32> to vector<8x512xbf16>
    %c0_18 = arith.constant 0 : index
    %c0_19 = arith.constant 0 : index
    %25 = vector.load %arg8[%c0_18, %c0_19] : memref<512x128xbf16, #tpu.memory_space<vmem>>, vector<512x128xbf16>
    %cst_20 = arith.constant dense<0.000000e+00> : vector<8x128xf32>
    %26 = tpu.matmul %24, %25, %cst_20 {dimension_numbers = #tpu.dot_dimension_numbers<[1], [0], [0], [1], [0, 0, 1, 1], [], []>} : vector<8x512xbf16>, vector<512x128xbf16>, vector<8x128xf32> -> vector<8x128xf32>
    %c0_21 = arith.constant 0 : index
    %c0_22 = arith.constant 0 : index
    %27 = vector.load %arg9[%c0_21, %c0_22] : memref<1x128xf32, #tpu.memory_space<vmem>>, vector<1x128xf32>
    %28 = vector.broadcast %27 : vector<1x128xf32> to vector<8x128xf32>
    %29 = arith.addf %26, %28 : vector<8x128xf32>
    %cst_23 = arith.constant dense<0xFF800000> : vector<8xf32>
    %30 = vector.multi_reduction <maximumf>, %29, %cst_23 [1] : vector<8x128xf32> to vector<8xf32>
    %31 = vector.shape_cast %30 : vector<8xf32> to vector<8x1xf32>
    %32 = vector.broadcast %31 : vector<8x1xf32> to vector<8x128xf32>
    %33 = arith.subf %29, %32 : vector<8x128xf32>
    %34 = math.exp %33 : vector<8x128xf32>
    %cst_24 = arith.constant dense<0.000000e+00> : vector<8xf32>
    %35 = vector.multi_reduction <add>, %34, %cst_24 [1] : vector<8x128xf32> to vector<8xf32>
    %36 = vector.shape_cast %35 : vector<8xf32> to vector<8x1xf32>
    %37 = vector.broadcast %36 : vector<8x1xf32> to vector<8x128xf32>
    %38 = arith.divf %34, %37 : vector<8x128xf32>
    %c0_25 = arith.constant 0 : index
    %c0_26 = arith.constant 0 : index
    %39 = vector.load %arg10[%c0_25, %c0_26] : memref<8x128xf32, #tpu.memory_space<vmem>>, vector<8x128xf32>
    tpu.vector_store %arg10[%c0_25, %c0_26], %38 {strides = array<i32>} : memref<8x128xf32, #tpu.memory_space<vmem>>, vector<8x128xf32>,
    return
  }
  func.func @transform_0(%arg0: i32) -> (i32, i32) {
    %c0_i32 = arith.constant 0 : i32
    %c0_i32_0 = arith.constant 0 : i32
    return %arg0, %c0_i32 : i32, i32
  }
  func.func @transform_1(%arg0: i32) -> (i32, i32) {
    %c0_i32 = arith.constant 0 : i32
    %c0_i32_0 = arith.constant 0 : i32
    %c0_i32_1 = arith.constant 0 : i32
    return %c0_i32, %c0_i32_0 : i32, i32
  }
  func.func @transform_2(%arg0: i32) -> (i32, i32) {
    %c0_i32 = arith.constant 0 : i32
    %c0_i32_0 = arith.constant 0 : i32
    %c0_i32_1 = arith.constant 0 : i32
    return %c0_i32, %c0_i32_0 : i32, i32
  }
  func.func @transform_3(%arg0: i32) -> (i32, i32) {
    %c0_i32 = arith.constant 0 : i32
    %c0_i32_0 = arith.constant 0 : i32
    %c0_i32_1 = arith.constant 0 : i32
    return %c0_i32, %c0_i32_0 : i32, i32
  }
  func.func @transform_4(%arg0: i32) -> (i32, i32) {
    %c0_i32 = arith.constant 0 : i32
    %c0_i32_0 = arith.constant 0 : i32
    %c0_i32_1 = arith.constant 0 : i32
    return %c0_i32, %c0_i32_0 : i32, i32
  }
  func.func @transform_5(%arg0: i32) -> (i32, i32) {
    %c0_i32 = arith.constant 0 : i32
    %c0_i32_0 = arith.constant 0 : i32
    %c0_i32_1 = arith.constant 0 : i32
    return %c0_i32, %c0_i32_0 : i32, i32
  }
  func.func @transform_6(%arg0: i32) -> (i32, i32) {
    %c0_i32 = arith.constant 0 : i32
    %c0_i32_0 = arith.constant 0 : i32
    %c0_i32_1 = arith.constant 0 : i32
    return %c0_i32, %c0_i32_0 : i32, i32
  }
  func.func @transform_7(%arg0: i32) -> (i32, i32) {
    %c0_i32 = arith.constant 0 : i32
    %c0_i32_0 = arith.constant 0 : i32
    %c0_i32_1 = arith.constant 0 : i32
    return %c0_i32, %c0_i32_0 : i32, i32
  }
  func.func @transform_8(%arg0: i32) -> (i32, i32) {
    %c0_i32 = arith.constant 0 : i32
    %c0_i32_0 = arith.constant 0 : i32
    %c0_i32_1 = arith.constant 0 : i32
    return %c0_i32, %c0_i32_0 : i32, i32
  }
  func.func @transform_9(%arg0: i32) -> (i32, i32) {
    %c0_i32 = arith.constant 0 : i32
    %c0_i32_0 = arith.constant 0 : i32
    return %arg0, %c0_i32 : i32, i32
  }
}

</mosaic_0001>

<llo_original>
// kernel: tpu_custom_call.1
$region0: #{tpu_custom_call.1}
  #allocation0 [shape = 'u32[]', space=smem, size = 0x4, offset = 0x4, fixed_abs, tag = 'smem constant byte address 0x4 - core index']
  #allocation1 [shape = 'u32[144,128]{1,0:T(1,128)}', space=vmem, size = 0x12000, scoped, tag = 'internal scratch']
  %s0 = inlined_call_operand.hbm [shape: bf16[8,32], index: 0, kind: input, shape index: {}]
  %s1 = inlined_call_operand.hbm [shape: bf16[32,256], index: 1, kind: input, shape index: {}]
  %s2 = inlined_call_operand.vmem [shape: f32[1,256], index: 2, kind: input, shape index: {}]
  %s3 = inlined_call_operand.hbm [shape: bf16[256,512], index: 3, kind: input, shape index: {}]
  %s4 = inlined_call_operand.vmem [shape: f32[1,512], index: 4, kind: input, shape index: {}]
  %s5 = inlined_call_operand.hbm [shape: bf16[512,512], index: 5, kind: input, shape index: {}]
  %s6 = inlined_call_operand.vmem [shape: f32[1,512], index: 6, kind: input, shape index: {}]
  %s7 = inlined_call_operand.hbm [shape: bf16[512,128], index: 7, kind: input, shape index: {}]
  %s8 = inlined_call_operand.vmem [shape: f32[1,128], index: 8, kind: input, shape index: {}]
  %s9 = inlined_call_operand.hbm [shape: f32[8,128], index: 9, kind: output, shape index: {}]
  %s10 = sld [smem:[#allocation0]]
  $region66: #{tpu_custom_call.1} parent=0
    _
  %s12 = ssub.s32 1, %s10
  %s13 = scalar_select 0, %s12, %s10
  $region1: #{tpu_custom_call.1} parent=0
    #allocation2 [shape = 'u8[2048]{0}', space=vmem, size = 0x800, scoped, tag = 'input window, operand 0, single buffered']
    #allocation3 [shape = 's32[1]{0}', space=sflag, size = 0x4, scoped, tag = 'scoped memory for tpu_custom_call.1']
    #allocation4 [shape = 's32[1]{0}', space=sflag, size = 0x4, scoped, tag = 'scoped memory for tpu_custom_call.1']
    #allocation5 [shape = 'u8[16384]{0}', space=vmem, size = 0x4000, scoped, tag = 'input window, operand 1, single buffered']
    #allocation6 [shape = 's32[1]{0}', space=sflag, size = 0x4, scoped, tag = 'scoped memory for tpu_custom_call.1']
    #allocation7 [shape = 'u8[262144]{0}', space=vmem, size = 0x40000, scoped, tag = 'input window, operand 3, single buffered']
    #allocation8 [shape = 'u8[524288]{0}', space=vmem, size = 0x80000, scoped, tag = 'input window, operand 5, single buffered']
    #allocation9 [shape = 's32[1]{0}', space=sflag, size = 0x4, scoped, tag = 'scoped memory for tpu_custom_call.1']
    #allocation10 [shape = 'u8[131072]{0}', space=vmem, size = 0x20000, scoped, tag = 'input window, operand 7, single buffered']
    #allocation11 [shape = 'u8[4096]{0}', space=vmem, size = 0x1000, scoped, tag = 'output window, operand 0, single buffered']
    %14 = vsyncpa [#allocation3], 0
    %15 = vsyncpa [#allocation6], 0
    %16 = vsyncpa [#allocation9], 0
    %17 = vsyncpa [#allocation4], 0
    // Predicated region
    $region2: #{tpu_custom_call.1} parent=1 // pred_check
      _
    $region3: #{tpu_custom_call.1} parent=1 // pred_check_branch
      %19 = sbr.rel (0) target = $region5
    $region4: #{tpu_custom_call.1} parent=1 // pred_region
      %s21 = ssub.s32 64, 64
      %22 = vsyncadd [#allocation3], %s21
      %s24 = sshll.u32 [#allocation2], 4
      %s25 = int_to_ptr.vmem [resolvable:$true] %s24
      %27 = dma.hbm_to_vmem [thread:$0]  %s0, 64, %s25, [#allocation3]
    $region5: #{tpu_custom_call.1} parent=1 // pred_fallthru
      _
    // Predicated region
    $region6: #{tpu_custom_call.1} parent=1 // pred_check
      _
    $region7: #{tpu_custom_call.1} parent=1 // pred_check_branch
      %29 = sbr.rel (0) target = $region9
    $region8: #{tpu_custom_call.1} parent=1 // pred_region
      %s31 = ssub.s32 512, 512
      %32 = vsyncadd [#allocation6], %s31
      %s33 = sshll.u32 [#allocation5], 4
      %s34 = int_to_ptr.vmem [resolvable:$true] %s33
      %39 = dma.hbm_to_vmem [thread:$0]  %s1, 512, %s34, [#allocation6], 128, 128, 8
    $region9: #{tpu_custom_call.1} parent=1 // pred_fallthru
      _
    // Predicated region
    $region10: #{tpu_custom_call.1} parent=1 // pred_check
      _
    $region11: #{tpu_custom_call.1} parent=1 // pred_check_branch
      %41 = sbr.rel (0) target = $region13
    $region12: #{tpu_custom_call.1} parent=1 // pred_region
      _
    $region13: #{tpu_custom_call.1} parent=1 // pred_fallthru
      _
    // Predicated region
    $region14: #{tpu_custom_call.1} parent=1 // pred_check
      _
    $region15: #{tpu_custom_call.1} parent=1 // pred_check_branch
      %43 = sbr.rel (0) target = $region17
    $region16: #{tpu_custom_call.1} parent=1 // pred_region
      %s45 = ssub.s32 8192, 8192
      %46 = vsyncadd [#allocation6], %s45
      %s47 = sshll.u32 [#allocation7], 4
      %s48 = int_to_ptr.vmem [resolvable:$true] %s47
      %53 = dma.hbm_to_vmem [thread:$0]  %s3, 8192, %s48, [#allocation6], 256, 256, 16
    $region17: #{tpu_custom_call.1} parent=1 // pred_fallthru
      _
    // Predicated region
    $region18: #{tpu_custom_call.1} parent=1 // pred_check
      _
    $region19: #{tpu_custom_call.1} parent=1 // pred_check_branch
      %55 = sbr.rel (0) target = $region21
    $region20: #{tpu_custom_call.1} parent=1 // pred_region
      _
    $region21: #{tpu_custom_call.1} parent=1 // pred_fallthru
      _
    // Predicated region
    $region22: #{tpu_custom_call.1} parent=1 // pred_check
      _
    $region23: #{tpu_custom_call.1} parent=1 // pred_check_branch
      %57 = sbr.rel (0) target = $region25
    $region24: #{tpu_custom_call.1} parent=1 // pred_region
      %s59 = ssub.s32 16384, 16384
      %60 = vsyncadd [#allocation9], %s59
      %s61 = sshll.u32 [#allocation8], 4
      %s62 = int_to_ptr.vmem [resolvable:$true] %s61
      %67 = dma.hbm_to_vmem [thread:$0]  %s5, 16384, %s62, [#allocation9], 256, 256, 16
    $region25: #{tpu_custom_call.1} parent=1 // pred_fallthru
      _
    // Predicated region
    $region26: #{tpu_custom_call.1} parent=1 // pred_check
      _
    $region27: #{tpu_custom_call.1} parent=1 // pred_check_branch
      %69 = sbr.rel (0) target = $region29
    $region28: #{tpu_custom_call.1} parent=1 // pred_region
      _
    $region29: #{tpu_custom_call.1} parent=1 // pred_fallthru
      _
    // Predicated region
    $region30: #{tpu_custom_call.1} parent=1 // pred_check
      _
    $region31: #{tpu_custom_call.1} parent=1 // pred_check_branch
      %71 = sbr.rel (0) target = $region33
    $region32: #{tpu_custom_call.1} parent=1 // pred_region
      %s73 = ssub.s32 4096, 4096
      %74 = vsyncadd [#allocation9], %s73
      %s75 = sshll.u32 [#allocation10], 4
      %s76 = int_to_ptr.vmem [resolvable:$true] %s75
      %81 = dma.hbm_to_vmem [thread:$0]  %s7, 4096, %s76, [#allocation9], 64, 64, 4
    $region33: #{tpu_custom_call.1} parent=1 // pred_fallthru
      _
    // Predicated region
    $region34: #{tpu_custom_call.1} parent=1 // pred_check
      _
    $region35: #{tpu_custom_call.1} parent=1 // pred_check_branch
      %83 = sbr.rel (0) target = $region37
    $region36: #{tpu_custom_call.1} parent=1 // pred_region
      _
    $region37: #{tpu_custom_call.1} parent=1 // pred_fallthru
      _
    // Predicated region
    $region38: #{tpu_custom_call.1} parent=1 // pred_check
      _
    $region39: #{tpu_custom_call.1} parent=1 // pred_check_branch
      %85 = sbr.rel (0) target = $region41
    $region40: #{tpu_custom_call.1} parent=1 // pred_region
      %86 = dma.done [#allocation3], 64
    $region41: #{tpu_custom_call.1} parent=1 // pred_fallthru
      _
    // Predicated region
    $region42: #{tpu_custom_call.1} parent=1 // pred_check
      _
    $region43: #{tpu_custom_call.1} parent=1 // pred_check_branch
      %88 = sbr.rel (0) target = $region45
    $region44: #{tpu_custom_call.1} parent=1 // pred_region
      %89 = dma.done [#allocation6], 512
    $region45: #{tpu_custom_call.1} parent=1 // pred_fallthru
      _
    // Predicated region
    $region46: #{tpu_custom_call.1} parent=1 // pred_check
      _
    $region47: #{tpu_custom_call.1} parent=1 // pred_check_branch
      %91 = sbr.rel (0) target = $region49
    $region48: #{tpu_custom_call.1} parent=1 // pred_region
      %92 = dma.done [#allocation6], 8192
    $region49: #{tpu_custom_call.1} parent=1 // pred_fallthru
      _
    // Predicated region
    $region50: #{tpu_custom_call.1} parent=1 // pred_check
      _
    $region51: #{tpu_custom_call.1} parent=1 // pred_check_branch
      %94 = sbr.rel (0) target = $region53
    $region52: #{tpu_custom_call.1} parent=1 // pred_region
      %95 = dma.done [#allocation9], 16384
    $region53: #{tpu_custom_call.1} parent=1 // pred_fallthru
      _
    // Predicated region
    $region54: #{tpu_custom_call.1} parent=1 // pred_check
      _
    $region55: #{tpu_custom_call.1} parent=1 // pred_check_branch
      %97 = sbr.rel (0) target = $region57
    $region56: #{tpu_custom_call.1} parent=1 // pred_region
      %98 = dma.done [#allocation9], 4096
    $region57: #{tpu_custom_call.1} parent=1 // pred_fallthru
      _
    %v100 = vld [vmem:[#allocation2] sm:$0xf]
    %v101 = vld [vmem:[#allocation5] sm:$0xff]
    %v102 = vld [vmem:[#allocation5 + $0x8] sm:$0xff]
    %v103 = vld [vmem:[#allocation5 + $0x10] sm:$0xff]
    %v104 = vld [vmem:[#allocation5 + $0x18] sm:$0xff]
    %v105 = vld [vmem:[%s2] sm:$0x3]
    %v107 = vlaneseq
    %v108 = vshrl.u32 %v107, 7
    %v109 = vsub.s32 0, %v108
    %v110 = vrot.slane %v105, %v109
    %v111 = vlaneseq
    %v112 = vshrl.u32 %v111, 7
    %v113 = vsub.s32 1, %v112
    %v114 = vrot.slane %v105, %v113
    %v121 = vunpack.c.l.b16 %v101
    %v122 = vunpack.c.h.b16 %v101
    %v123 = vunpack.c.l.b16 %v102
    %v124 = vunpack.c.h.b16 %v102
    %v125 = vunpack.c.l.b16 %v103
    %v126 = vunpack.c.h.b16 %v103
    %v127 = vunpack.c.l.b16 %v104
    %v128 = vunpack.c.h.b16 %v104
    %v129 = vpack.c.b16 %v123, %v121
    %v130 = vpack.c.b16 %v124, %v122
    %v131 = vpack.c.b16 %v127, %v125
    %v132 = vpack.c.b16 %v128, %v126
    %vm137 = vcmask 261120
    %v139 = vsel %vm137, %v100, 0
    %141 = vmatprep.subr.bf16.mxu0 %v130
    %142 = vmatpush1.bf16.msra.mxu0 %v129
    %143 = vmatprep.subr.bf16.mxu0 %v132
    %144 = vmatpush1.bf16.msra.mxu0 %v131
    %145 = vmatprep.subr.bf16.mxu0 0
    %146 = vmatpush1.bf16.msra.mxu0 0
    %147 = vmatprep.subr.bf16.mxu0 0
    %148 = vmatpush1.bf16.msra.mxu0 0
    %149 = vmatprep.subr.bf16.mxu0 0
    %150 = vmatpush1.bf16.msra.mxu0 0
    %151 = vmatprep.subr.bf16.mxu0 0
    %152 = vmatpush1.bf16.msra.mxu0 0
    %153 = vmatprep.subr.bf16.mxu0 0
    %154 = vmatpush1.bf16.msra.mxu0 0
    %155 = vmatprep.subr.bf16.mxu0 0
    %156 = vmatpush1.bf16.msra.mxu0 0
    %157 = vmatprep.subr.bf16.mxu0 0
    %158 = vmatpush1.bf16.msra.mxu0 0
    %159 = vmatprep.subr.bf16.mxu0 0
    %160 = vmatpush1.bf16.msra.mxu0 0
    %161 = vmatprep.subr.bf16.mxu0 0
    %162 = vmatpush1.bf16.msra.mxu0 0
    %163 = vmatprep.subr.bf16.mxu0 0
    %164 = vmatpush1.bf16.msra.mxu0 0
    %165 = vmatprep.subr.bf16.mxu0 0
    %166 = vmatpush1.bf16.msra.mxu0 0
    %167 = vmatprep.subr.bf16.mxu0 0
    %168 = vmatpush1.bf16.msra.mxu0 0
    %169 = vmatprep.subr.bf16.mxu0 0
    %170 = vmatpush1.bf16.msra.mxu0 0
    %171 = vmatprep.subr.bf16.mxu0 0
    %172 = vmatpush1.bf16.msra.mxu0 0
    %173 = vmatprep.mubr.bf16.mxu0 0
    %174 = vmatmul.mubr.bf16.gmra.mrb[0].mxu0 %v139
    %v175 = vpop.f32.mrb[0].mxu0
    %v176 = vadd.f32 %v110, %v175
    %v177 = vpop.f32.mrb[0].mxu0
    %v178 = vadd.f32 %v114, %v177
    %v179 = vpop.f32.mrb[0].mxu0
    %v180 = vpop.f32.mrb[0].mxu0
    %181 = vdwg.mxu0
    %v182 = vmax.f32 %v176, 0.0
    %v183 = vmax.f32 %v178, 0.0
    %v184 = vpack.c.bf16 %v182, %v182
    %v185 = vpack.c.bf16 %v183, %v183
    %v186 = vld [vmem:[#allocation7] sm:$0xff]
    %v187 = vld [vmem:[#allocation7 + $0x8] sm:$0xff]
    %v188 = vld [vmem:[#allocation7 + $0x10] sm:$0xff]
    %v189 = vld [vmem:[#allocation7 + $0x18] sm:$0xff]
    %v190 = vld [vmem:[#allocation7 + $0x20] sm:$0xff]
    %v191 = vld [vmem:[#allocation7 + $0x28] sm:$0xff]
    %v192 = vld [vmem:[#allocation7 + $0x30] sm:$0xff]
    %v193 = vld [vmem:[#allocation7 + $0x38] sm:$0xff]
    %v194 = vld [vmem:[#allocation7 + $0x40] sm:$0xff]
    %v195 = vld [vmem:[#allocation7 + $0x48] sm:$0xff]
    %v196 = vld [vmem:[#allocation7 + $0x50] sm:$0xff]
    %v197 = vld [vmem:[#allocation7 + $0x58] sm:$0xff]
    %v198 = vld [vmem:[#allocation7 + $0x60] sm:$0xff]
    %v199 = vld [vmem:[#allocation7 + $0x68] sm:$0xff]
    %v200 = vld [vmem:[#allocation7 + $0x70] sm:$0xff]
    %v201 = vld [vmem:[#allocation7 + $0x78] sm:$0xff]
    %v202 = vld [vmem:[#allocation7 + $0x80] sm:$0xff]
    %v203 = vld [vmem:[#allocation7 + $0x88] sm:$0xff]
    %v204 = vld [vmem:[#allocation7 + $0x90] sm:$0xff]
    %v205 = vld [vmem:[#allocation7 + $0x98] sm:$0xff]
    %v206 = vld [vmem:[#allocation7 + $0xa0] sm:$0xff]
    %v207 = vld [vmem:[#allocation7 + $0xa8] sm:$0xff]
    %v208 = vld [vmem:[#allocation7 + $0xb0] sm:$0xff]
    %v209 = vld [vmem:[#allocation7 + $0xb8] sm:$0xff]
    %v210 = vld [vmem:[#allocation7 + $0xc0] sm:$0xff]
    %v211 = vld [vmem:[#allocation7 + $0xc8] sm:$0xff]
    %v212 = vld [vmem:[#allocation7 + $0xd0] sm:$0xff]
    %v213 = vld [vmem:[#allocation7 + $0xd8] sm:$0xff]
    %v214 = vld [vmem:[#allocation7 + $0xe0] sm:$0xff]
    %v215 = vld [vmem:[#allocation7 + $0xe8] sm:$0xff]
    %v216 = vld [vmem:[#allocation7 + $0xf0] sm:$0xff]
    %v217 = vld [vmem:[#allocation7 + $0xf8] sm:$0xff]
    %v218 = vld [vmem:[#allocation7 + $0x100] sm:$0xff]
    %v219 = vld [vmem:[#allocation7 + $0x108] sm:$0xff]
    %v220 = vld [vmem:[#allocation7 + $0x110] sm:$0xff]
    %v221 = vld [vmem:[#allocation7 + $0x118] sm:$0xff]
    %v222 = vld [vmem:[#allocation7 + $0x120] sm:$0xff]
    %v223 = vld [vmem:[#allocation7 + $0x128] sm:$0xff]
    %v224 = vld [vmem:[#allocation7 + $0x130] sm:$0xff]
    %v225 = vld [vmem:[#allocation7 + $0x138] sm:$0xff]
    %v226 = vld [vmem:[#allocation7 + $0x140] sm:$0xff]
    %v227 = vld [vmem:[#allocation7 + $0x148] sm:$0xff]
    %v228 = vld [vmem:[#allocation7 + $0x150] sm:$0xff]
    %v229 = vld [vmem:[#allocation7 + $0x158] sm:$0xff]
    %v230 = vld [vmem:[#allocation7 + $0x160] sm:$0xff]
    %v231 = vld [vmem:[#allocation7 + $0x168] sm:$0xff]
    %v232 = vld [vmem:[#allocation7 + $0x170] sm:$0xff]
    %v233 = vld [vmem:[#allocation7 + $0x178] sm:$0xff]
    %v234 = vld [vmem:[#allocation7 + $0x180] sm:$0xff]
    %v235 = vld [vmem:[#allocation7 + $0x188] sm:$0xff]
    %v236 = vld [vmem:[#allocation7 + $0x190] sm:$0xff]
    %v237 = vld [vmem:[#allocation7 + $0x198] sm:$0xff]
    %v238 = vld [vmem:[#allocation7 + $0x1a0] sm:$0xff]
    %v239 = vld [vmem:[#allocation7 + $0x1a8] sm:$0xff]
    %v240 = vld [vmem:[#allocation7 + $0x1b0] sm:$0xff]
    %v241 = vld [vmem:[#allocation7 + $0x1b8] sm:$0xff]
    %v242 = vld [vmem:[#allocation7 + $0x1c0] sm:$0xff]
    %v243 = vld [vmem:[#allocation7 + $0x1c8] sm:$0xff]
    %v244 = vld [vmem:[#allocation7 + $0x1d0] sm:$0xff]
    %v245 = vld [vmem:[#allocation7 + $0x1d8] sm:$0xff]
    %v246 = vld [vmem:[#allocation7 + $0x1e0] sm:$0xff]
    %v247 = vld [vmem:[#allocation7 + $0x1e8] sm:$0xff]
    %v248 = vld [vmem:[#allocation7 + $0x1f0] sm:$0xff]
    %v249 = vld [vmem:[#allocation7 + $0x1f8] sm:$0xff]
    %v250 = vld [vmem:[%s4] sm:$0xf]
    %v252 = vlaneseq
    %v253 = vshrl.u32 %v252, 7
    %v254 = vsub.s32 0, %v253
    %v255 = vrot.slane %v250, %v254
    %v256 = vlaneseq
    %v257 = vshrl.u32 %v256, 7
    %v258 = vsub.s32 1, %v257
    %v259 = vrot.slane %v250, %v258
    %v260 = vlaneseq
    %v261 = vshrl.u32 %v260, 7
    %v262 = vsub.s32 2, %v261
    %v263 = vrot.slane %v250, %v262
    %v264 = vlaneseq
    %v265 = vshrl.u32 %v264, 7
    %v266 = vsub.s32 3, %v265
    %v267 = vrot.slane %v250, %v266
    %v336 = vunpack.c.l.b16 %v186
    %v337 = vunpack.c.h.b16 %v186
    %v338 = vunpack.c.l.b16 %v187
    %v339 = vunpack.c.h.b16 %v187
    %v340 = vunpack.c.l.b16 %v188
    %v341 = vunpack.c.h.b16 %v188
    %v342 = vunpack.c.l.b16 %v189
    %v343 = vunpack.c.h.b16 %v189
    %v344 = vunpack.c.l.b16 %v190
    %v345 = vunpack.c.h.b16 %v190
    %v346 = vunpack.c.l.b16 %v191
    %v347 = vunpack.c.h.b16 %v191
    %v348 = vunpack.c.l.b16 %v192
    %v349 = vunpack.c.h.b16 %v192
    %v350 = vunpack.c.l.b16 %v193
    %v351 = vunpack.c.h.b16 %v193
    %v352 = vunpack.c.l.b16 %v194
    %v353 = vunpack.c.h.b16 %v194
    %v354 = vunpack.c.l.b16 %v195
    %v355 = vunpack.c.h.b16 %v195
    %v356 = vunpack.c.l.b16 %v196
    %v357 = vunpack.c.h.b16 %v196
    %v358 = vunpack.c.l.b16 %v197
    %v359 = vunpack.c.h.b16 %v197
    %v360 = vunpack.c.l.b16 %v198
    %v361 = vunpack.c.h.b16 %v198
    %v362 = vunpack.c.l.b16 %v199
    %v363 = vunpack.c.h.b16 %v199
    %v364 = vunpack.c.l.b16 %v200
    %v365 = vunpack.c.h.b16 %v200
    %v366 = vunpack.c.l.b16 %v201
    %v367 = vunpack.c.h.b16 %v201
    %v368 = vunpack.c.l.b16 %v202
    %v369 = vunpack.c.h.b16 %v202
    %v370 = vunpack.c.l.b16 %v203
    %v371 = vunpack.c.h.b16 %v203
    %v372 = vunpack.c.l.b16 %v204
    %v373 = vunpack.c.h.b16 %v204
    %v374 = vunpack.c.l.b16 %v205
    %v375 = vunpack.c.h.b16 %v205
    %v376 = vunpack.c.l.b16 %v206
    %v377 = vunpack.c.h.b16 %v206
    %v378 = vunpack.c.l.b16 %v207
    %v379 = vunpack.c.h.b16 %v207
    %v380 = vunpack.c.l.b16 %v208
    %v381 = vunpack.c.h.b16 %v208
    %v382 = vunpack.c.l.b16 %v209
    %v383 = vunpack.c.h.b16 %v209
    %v384 = vunpack.c.l.b16 %v210
    %v385 = vunpack.c.h.b16 %v210
    %v386 = vunpack.c.l.b16 %v211
    %v387 = vunpack.c.h.b16 %v211
    %v388 = vunpack.c.l.b16 %v212
    %v389 = vunpack.c.h.b16 %v212
    %v390 = vunpack.c.l.b16 %v213
    %v391 = vunpack.c.h.b16 %v213
    %v392 = vunpack.c.l.b16 %v214
    %v393 = vunpack.c.h.b16 %v214
    %v394 = vunpack.c.l.b16 %v215
    %v395 = vunpack.c.h.b16 %v215
    %v396 = vunpack.c.l.b16 %v216
    %v397 = vunpack.c.h.b16 %v216
    %v398 = vunpack.c.l.b16 %v217
    %v399 = vunpack.c.h.b16 %v217
    %v400 = vunpack.c.l.b16 %v218
    %v401 = vunpack.c.h.b16 %v218
    %v402 = vunpack.c.l.b16 %v219
    %v403 = vunpack.c.h.b16 %v219
    %v404 = vunpack.c.l.b16 %v220
    %v405 = vunpack.c.h.b16 %v220
    %v406 = vunpack.c.l.b16 %v221
    %v407 = vunpack.c.h.b16 %v221
    %v408 = vunpack.c.l.b16 %v222
    %v409 = vunpack.c.h.b16 %v222
    %v410 = vunpack.c.l.b16 %v223
    %v411 = vunpack.c.h.b16 %v223
    %v412 = vunpack.c.l.b16 %v224
    %v413 = vunpack.c.h.b16 %v224
    %v414 = vunpack.c.l.b16 %v225
    %v415 = vunpack.c.h.b16 %v225
    %v416 = vunpack.c.l.b16 %v226
    %v417 = vunpack.c.h.b16 %v226
    %v418 = vunpack.c.l.b16 %v227
    %v419 = vunpack.c.h.b16 %v227
    %v420 = vunpack.c.l.b16 %v228
    %v421 = vunpack.c.h.b16 %v228
    %v422 = vunpack.c.l.b16 %v229
    %v423 = vunpack.c.h.b16 %v229
    %v424 = vunpack.c.l.b16 %v230
    %v425 = vunpack.c.h.b16 %v230
    %v426 = vunpack.c.l.b16 %v231
    %v427 = vunpack.c.h.b16 %v231
    %v428 = vunpack.c.l.b16 %v232
    %v429 = vunpack.c.h.b16 %v232
    %v430 = vunpack.c.l.b16 %v233
    %v431 = vunpack.c.h.b16 %v233
    %v432 = vunpack.c.l.b16 %v234
    %v433 = vunpack.c.h.b16 %v234
    %v434 = vunpack.c.l.b16 %v235
    %v435 = vunpack.c.h.b16 %v235
    %v436 = vunpack.c.l.b16 %v236
    %v437 = vunpack.c.h.b16 %v236
    %v438 = vunpack.c.l.b16 %v237
    %v439 = vunpack.c.h.b16 %v237
    %v440 = vunpack.c.l.b16 %v238
    %v441 = vunpack.c.h.b16 %v238
    %v442 = vunpack.c.l.b16 %v239
    %v443 = vunpack.c.h.b16 %v239
    %v444 = vunpack.c.l.b16 %v240
    %v445 = vunpack.c.h.b16 %v240
    %v446 = vunpack.c.l.b16 %v241
    %v447 = vunpack.c.h.b16 %v241
    %v448 = vunpack.c.l.b16 %v242
    %v449 = vunpack.c.h.b16 %v242
    %v450 = vunpack.c.l.b16 %v243
    %v451 = vunpack.c.h.b16 %v243
    %v452 = vunpack.c.l.b16 %v244
    %v453 = vunpack.c.h.b16 %v244
    %v454 = vunpack.c.l.b16 %v245
    %v455 = vunpack.c.h.b16 %v245
    %v456 = vunpack.c.l.b16 %v246
    %v457 = vunpack.c.h.b16 %v246
    %v458 = vunpack.c.l.b16 %v247
    %v459 = vunpack.c.h.b16 %v247
    %v460 = vunpack.c.l.b16 %v248
    %v461 = vunpack.c.h.b16 %v248
    %v462 = vunpack.c.l.b16 %v249
    %v463 = vunpack.c.h.b16 %v249
    %v464 = vpack.c.b16 %v340, %v336
    %v465 = vpack.c.b16 %v341, %v337
    %v466 = vpack.c.b16 %v342, %v338
    %v467 = vpack.c.b16 %v343, %v339
    %v468 = vpack.c.b16 %v348, %v344
    %v469 = vpack.c.b16 %v349, %v345
    %v470 = vpack.c.b16 %v350, %v346
    %v471 = vpack.c.b16 %v351, %v347
    %v472 = vpack.c.b16 %v356, %v352
    %v473 = vpack.c.b16 %v357, %v353
    %v474 = vpack.c.b16 %v358, %v354
    %v475 = vpack.c.b16 %v359, %v355
    %v476 = vpack.c.b16 %v364, %v360
    %v477 = vpack.c.b16 %v365, %v361
    %v478 = vpack.c.b16 %v366, %v362
    %v479 = vpack.c.b16 %v367, %v363
    %v480 = vpack.c.b16 %v372, %v368
    %v481 = vpack.c.b16 %v373, %v369
    %v482 = vpack.c.b16 %v374, %v370
    %v483 = vpack.c.b16 %v375, %v371
    %v484 = vpack.c.b16 %v380, %v376
    %v485 = vpack.c.b16 %v381, %v377
    %v486 = vpack.c.b16 %v382, %v378
    %v487 = vpack.c.b16 %v383, %v379
    %v488 = vpack.c.b16 %v388, %v384
    %v489 = vpack.c.b16 %v389, %v385
    %v490 = vpack.c.b16 %v390, %v386
    %v491 = vpack.c.b16 %v391, %v387
    %v492 = vpack.c.b16 %v396, %v392
    %v493 = vpack.c.b16 %v397, %v393
    %v494 = vpack.c.b16 %v398, %v394
    %v495 = vpack.c.b16 %v399, %v395
    %v496 = vpack.c.b16 %v404, %v400
    %v497 = vpack.c.b16 %v405, %v401
    %v498 = vpack.c.b16 %v406, %v402
    %v499 = vpack.c.b16 %v407, %v403
    %v500 = vpack.c.b16 %v412, %v408
    %v501 = vpack.c.b16 %v413, %v409
    %v502 = vpack.c.b16 %v414, %v410
    %v503 = vpack.c.b16 %v415, %v411
    %v504 = vpack.c.b16 %v420, %v416
    %v505 = vpack.c.b16 %v421, %v417
    %v506 = vpack.c.b16 %v422, %v418
    %v507 = vpack.c.b16 %v423, %v419
    %v508 = vpack.c.b16 %v428, %v424
    %v509 = vpack.c.b16 %v429, %v425
    %v510 = vpack.c.b16 %v430, %v426
    %v511 = vpack.c.b16 %v431, %v427
    %v512 = vpack.c.b16 %v436, %v432
    %v513 = vpack.c.b16 %v437, %v433
    %v514 = vpack.c.b16 %v438, %v434
    %v515 = vpack.c.b16 %v439, %v435
    %v516 = vpack.c.b16 %v444, %v440
    %v517 = vpack.c.b16 %v445, %v441
    %v518 = vpack.c.b16 %v446, %v442
    %v519 = vpack.c.b16 %v447, %v443
    %v520 = vpack.c.b16 %v452, %v448
    %v521 = vpack.c.b16 %v453, %v449
    %v522 = vpack.c.b16 %v454, %v450
    %v523 = vpack.c.b16 %v455, %v451
    %v524 = vpack.c.b16 %v460, %v456
    %v525 = vpack.c.b16 %v461, %v457
    %v526 = vpack.c.b16 %v462, %v458
    %v527 = vpack.c.b16 %v463, %v459
    %592 = vmatprep.subr.bf16.mxu0 %v465
    %593 = vmatpush1.bf16.msra.mxu0 %v464
    %594 = vmatprep.subr.bf16.mxu0 %v469
    %595 = vmatpush1.bf16.msra.mxu0 %v468
    %596 = vmatprep.subr.bf16.mxu0 %v473
    %597 = vmatpush1.bf16.msra.mxu0 %v472
    %598 = vmatprep.subr.bf16.mxu0 %v477
    %599 = vmatpush1.bf16.msra.mxu0 %v476
    %600 = vmatprep.subr.bf16.mxu0 %v481
    %601 = vmatpush1.bf16.msra.mxu0 %v480
    %602 = vmatprep.subr.bf16.mxu0 %v485
    %603 = vmatpush1.bf16.msra.mxu0 %v484
    %604 = vmatprep.subr.bf16.mxu0 %v489
    %605 = vmatpush1.bf16.msra.mxu0 %v488
    %606 = vmatprep.subr.bf16.mxu0 %v493
    %607 = vmatpush1.bf16.msra.mxu0 %v492
    %608 = vmatprep.subr.bf16.mxu0 %v497
    %609 = vmatpush1.bf16.msra.mxu0 %v496
    %610 = vmatprep.subr.bf16.mxu0 %v501
    %611 = vmatpush1.bf16.msra.mxu0 %v500
    %612 = vmatprep.subr.bf16.mxu0 %v505
    %613 = vmatpush1.bf16.msra.mxu0 %v504
    %614 = vmatprep.subr.bf16.mxu0 %v509
    %615 = vmatpush1.bf16.msra.mxu0 %v508
    %616 = vmatprep.subr.bf16.mxu0 %v513
    %617 = vmatpush1.bf16.msra.mxu0 %v512
    %618 = vmatprep.subr.bf16.mxu0 %v517
    %619 = vmatpush1.bf16.msra.mxu0 %v516
    %620 = vmatprep.subr.bf16.mxu0 %v521
    %621 = vmatpush1.bf16.msra.mxu0 %v520
    %622 = vmatprep.subr.bf16.mxu0 %v525
    %623 = vmatpush1.bf16.msra.mxu0 %v524
    %624 = vmatprep.mubr.bf16.mxu0 %v185
    %625 = vmatmul.mubr.bf16.gmra.mrb[0].mxu0 %v184
    %v626 = vpop.f32.mrb[0].mxu0
    %v627 = vadd.f32 %v255, %v626
    %v628 = vpop.f32.mrb[0].mxu0
    %v629 = vadd.f32 %v259, %v628
    %v630 = vpop.f32.mrb[0].mxu0
    %v631 = vpop.f32.mrb[0].mxu0
    %632 = vdwg.mxu0
    %633 = vmatprep.subr.bf16.mxu0 %v467
    %634 = vmatpush1.bf16.msra.mxu0 %v466
    %635 = vmatprep.subr.bf16.mxu0 %v471
    %636 = vmatpush1.bf16.msra.mxu0 %v470
    %637 = vmatprep.subr.bf16.mxu0 %v475
    %638 = vmatpush1.bf16.msra.mxu0 %v474
    %639 = vmatprep.subr.bf16.mxu0 %v479
    %640 = vmatpush1.bf16.msra.mxu0 %v478
    %641 = vmatprep.subr.bf16.mxu0 %v483
    %642 = vmatpush1.bf16.msra.mxu0 %v482
    %643 = vmatprep.subr.bf16.mxu0 %v487
    %644 = vmatpush1.bf16.msra.mxu0 %v486
    %645 = vmatprep.subr.bf16.mxu0 %v491
    %646 = vmatpush1.bf16.msra.mxu0 %v490
    %647 = vmatprep.subr.bf16.mxu0 %v495
    %648 = vmatpush1.bf16.msra.mxu0 %v494
    %649 = vmatprep.subr.bf16.mxu0 %v499
    %650 = vmatpush1.bf16.msra.mxu0 %v498
    %651 = vmatprep.subr.bf16.mxu0 %v503
    %652 = vmatpush1.bf16.msra.mxu0 %v502
    %653 = vmatprep.subr.bf16.mxu0 %v507
    %654 = vmatpush1.bf16.msra.mxu0 %v506
    %655 = vmatprep.subr.bf16.mxu0 %v511
    %656 = vmatpush1.bf16.msra.mxu0 %v510
    %657 = vmatprep.subr.bf16.mxu0 %v515
    %658 = vmatpush1.bf16.msra.mxu0 %v514
    %659 = vmatprep.subr.bf16.mxu0 %v519
    %660 = vmatpush1.bf16.msra.mxu0 %v518
    %661 = vmatprep.subr.bf16.mxu0 %v523
    %662 = vmatpush1.bf16.msra.mxu0 %v522
    %663 = vmatprep.subr.bf16.mxu0 %v527
    %664 = vmatpush1.bf16.msra.mxu0 %v526
    %665 = vmatprep.mubr.bf16.mxu0 %v185
    %666 = vmatmul.mubr.bf16.gmra.mrb[0].mxu0 %v184
    %v667 = vpop.f32.mrb[0].mxu0
    %v668 = vadd.f32 %v263, %v667
    %v669 = vpop.f32.mrb[0].mxu0
    %v670 = vadd.f32 %v267, %v669
    %v671 = vpop.f32.mrb[0].mxu0
    %v672 = vpop.f32.mrb[0].mxu0
    %673 = vdwg.mxu0
    %v674 = vmax.f32 %v627, 0.0
    %v675 = vmax.f32 %v629, 0.0
    %v676 = vmax.f32 %v668, 0.0
    %v677 = vmax.f32 %v670, 0.0
    %v678 = vpack.c.bf16 %v674, %v674
    %v679 = vpack.c.bf16 %v675, %v675
    %v680 = vpack.c.bf16 %v676, %v676
    %v681 = vpack.c.bf16 %v677, %v677
    %v682 = vld [vmem:[#allocation8] sm:$0xff]
    %v683 = vld [vmem:[#allocation8 + $0x8] sm:$0xff]
    %v684 = vld [vmem:[#allocation8 + $0x10] sm:$0xff]
    %v685 = vld [vmem:[#allocation8 + $0x18] sm:$0xff]
    %v686 = vld [vmem:[#allocation8 + $0x20] sm:$0xff]
    %v687 = vld [vmem:[#allocation8 + $0x28] sm:$0xff]
    %v688 = vld [vmem:[#allocation8 + $0x30] sm:$0xff]
    %v689 = vld [vmem:[#allocation8 + $0x38] sm:$0xff]
    %v690 = vld [vmem:[#allocation8 + $0x40] sm:$0xff]
    %v691 = vld [vmem:[#allocation8 + $0x48] sm:$0xff]
    %v692 = vld [vmem:[#allocation8 + $0x50] sm:$0xff]
    %v693 = vld [vmem:[#allocation8 + $0x58] sm:$0xff]
    %v694 = vld [vmem:[#allocation8 + $0x60] sm:$0xff]
    %v695 = vld [vmem:[#allocation8 + $0x68] sm:$0xff]
    %v696 = vld [vmem:[#allocation8 + $0x70] sm:$0xff]
    %v697 = vld [vmem:[#allocation8 + $0x78] sm:$0xff]
    %v698 = vld [vmem:[#allocation8 + $0x80] sm:$0xff]
    %v699 = vld [vmem:[#allocation8 + $0x88] sm:$0xff]
    %v700 = vld [vmem:[#allocation8 + $0x90] sm:$0xff]
    %v701 = vld [vmem:[#allocation8 + $0x98] sm:$0xff]
    %v702 = vld [vmem:[#allocation8 + $0xa0] sm:$0xff]
    %v703 = vld [vmem:[#allocation8 + $0xa8] sm:$0xff]
    %v704 = vld [vmem:[#allocation8 + $0xb0] sm:$0xff]
    %v705 = vld [vmem:[#allocation8 + $0xb8] sm:$0xff]
    %v706 = vld [vmem:[#allocation8 + $0xc0] sm:$0xff]
    %v707 = vld [vmem:[#allocation8 + $0xc8] sm:$0xff]
    %v708 = vld [vmem:[#allocation8 + $0xd0] sm:$0xff]
    %v709 = vld [vmem:[#allocation8 + $0xd8] sm:$0xff]
    %v710 = vld [vmem:[#allocation8 + $0xe0] sm:$0xff]
    %v711 = vld [vmem:[#allocation8 + $0xe8] sm:$0xff]
    %v712 = vld [vmem:[#allocation8 + $0xf0] sm:$0xff]
    %v713 = vld [vmem:[#allocation8 + $0xf8] sm:$0xff]
    %v714 = vld [vmem:[#allocation8 + $0x100] sm:$0xff]
    %v715 = vld [vmem:[#allocation8 + $0x108] sm:$0xff]
    %v716 = vld [vmem:[#allocation8 + $0x110] sm:$0xff]
    %v717 = vld [vmem:[#allocation8 + $0x118] sm:$0xff]
    %v718 = vld [vmem:[#allocation8 + $0x120] sm:$0xff]
    %v719 = vld [vmem:[#allocation8 + $0x128] sm:$0xff]
    %v720 = vld [vmem:[#allocation8 + $0x130] sm:$0xff]
    %v721 = vld [vmem:[#allocation8 + $0x138] sm:$0xff]
    %v722 = vld [vmem:[#allocation8 + $0x140] sm:$0xff]
    %v723 = vld [vmem:[#allocation8 + $0x148] sm:$0xff]
    %v724 = vld [vmem:[#allocation8 + $0x150] sm:$0xff]
    %v725 = vld [vmem:[#allocation8 + $0x158] sm:$0xff]
    %v726 = vld [vmem:[#allocation8 + $0x160] sm:$0xff]
    %v727 = vld [vmem:[#allocation8 + $0x168] sm:$0xff]
    %v728 = vld [vmem:[#allocation8 + $0x170] sm:$0xff]
    %v729 = vld [vmem:[#allocation8 + $0x178] sm:$0xff]
    %v730 = vld [vmem:[#allocation8 + $0x180] sm:$0xff]
    %v731 = vld [vmem:[#allocation8 + $0x188] sm:$0xff]
    %v732 = vld [vmem:[#allocation8 + $0x190] sm:$0xff]
    %v733 = vld [vmem:[#allocation8 + $0x198] sm:$0xff]
    %v734 = vld [vmem:[#allocation8 + $0x1a0] sm:$0xff]
    %v735 = vld [vmem:[#allocation8 + $0x1a8] sm:$0xff]
    %v736 = vld [vmem:[#allocation8 + $0x1b0] sm:$0xff]
    %v737 = vld [vmem:[#allocation8 + $0x1b8] sm:$0xff]
    %v738 = vld [vmem:[#allocation8 + $0x1c0] sm:$0xff]
    %v739 = vld [vmem:[#allocation8 + $0x1c8] sm:$0xff]
    %v740 = vld [vmem:[#allocation8 + $0x1d0] sm:$0xff]
    %v741 = vld [vmem:[#allocation8 + $0x1d8] sm:$0xff]
    %v742 = vld [vmem:[#allocation8 + $0x1e0] sm:$0xff]
    %v743 = vld [vmem:[#allocation8 + $0x1e8] sm:$0xff]
    %v744 = vld [vmem:[#allocation8 + $0x1f0] sm:$0xff]
    %v745 = vld [vmem:[#allocation8 + $0x1f8] sm:$0xff]
    %v746 = vld [vmem:[#allocation8 + $0x200] sm:$0xff]
    %v747 = vld [vmem:[#allocation8 + $0x208] sm:$0xff]
    %v748 = vld [vmem:[#allocation8 + $0x210] sm:$0xff]
    %v749 = vld [vmem:[#allocation8 + $0x218] sm:$0xff]
    %v750 = vld [vmem:[#allocation8 + $0x220] sm:$0xff]
    %v751 = vld [vmem:[#allocation8 + $0x228] sm:$0xff]
    %v752 = vld [vmem:[#allocation8 + $0x230] sm:$0xff]
    %v753 = vld [vmem:[#allocation8 + $0x238] sm:$0xff]
    %v754 = vld [vmem:[#allocation8 + $0x240] sm:$0xff]
    %v755 = vld [vmem:[#allocation8 + $0x248] sm:$0xff]
    %v756 = vld [vmem:[#allocation8 + $0x250] sm:$0xff]
    %v757 = vld [vmem:[#allocation8 + $0x258] sm:$0xff]
    %v758 = vld [vmem:[#allocation8 + $0x260] sm:$0xff]
    %v759 = vld [vmem:[#allocation8 + $0x268] sm:$0xff]
    %v760 = vld [vmem:[#allocation8 + $0x270] sm:$0xff]
    %v761 = vld [vmem:[#allocation8 + $0x278] sm:$0xff]
    %v762 = vld [vmem:[#allocation8 + $0x280] sm:$0xff]
    %v763 = vld [vmem:[#allocation8 + $0x288] sm:$0xff]
    %v764 = vld [vmem:[#allocation8 + $0x290] sm:$0xff]
    %v765 = vld [vmem:[#allocation8 + $0x298] sm:$0xff]
    %v766 = vld [vmem:[#allocation8 + $0x2a0] sm:$0xff]
    %v767 = vld [vmem:[#allocation8 + $0x2a8] sm:$0xff]
    %v768 = vld [vmem:[#allocation8 + $0x2b0] sm:$0xff]
    %v769 = vld [vmem:[#allocation8 + $0x2b8] sm:$0xff]
    %v770 = vld [vmem:[#allocation8 + $0x2c0] sm:$0xff]
    %v771 = vld [vmem:[#allocation8 + $0x2c8] sm:$0xff]
    %v772 = vld [vmem:[#allocation8 + $0x2d0] sm:$0xff]
    %v773 = vld [vmem:[#allocation8 + $0x2d8] sm:$0xff]
    %v774 = vld [vmem:[#allocation8 + $0x2e0] sm:$0xff]
    %v775 = vld [vmem:[#allocation8 + $0x2e8] sm:$0xff]
    %v776 = vld [vmem:[#allocation8 + $0x2f0] sm:$0xff]
    %v777 = vld [vmem:[#allocation8 + $0x2f8] sm:$0xff]
    %v778 = vld [vmem:[#allocation8 + $0x300] sm:$0xff]
    %v779 = vld [vmem:[#allocation8 + $0x308] sm:$0xff]
    %v780 = vld [vmem:[#allocation8 + $0x310] sm:$0xff]
    %v781 = vld [vmem:[#allocation8 + $0x318] sm:$0xff]
    %v782 = vld [vmem:[#allocation8 + $0x320] sm:$0xff]
    %v783 = vld [vmem:[#allocation8 + $0x328] sm:$0xff]
    %v784 = vld [vmem:[#allocation8 + $0x330] sm:$0xff]
    %v785 = vld [vmem:[#allocation8 + $0x338] sm:$0xff]
    %v786 = vld [vmem:[#allocation8 + $0x340] sm:$0xff]
    %v787 = vld [vmem:[#allocation8 + $0x348] sm:$0xff]
    %v788 = vld [vmem:[#allocation8 + $0x350] sm:$0xff]
    %v789 = vld [vmem:[#allocation8 + $0x358] sm:$0xff]
    %v790 = vld [vmem:[#allocation8 + $0x360] sm:$0xff]
    %v791 = vld [vmem:[#allocation8 + $0x368] sm:$0xff]
    %v792 = vld [vmem:[#allocation8 + $0x370] sm:$0xff]
    %v793 = vld [vmem:[#allocation8 + $0x378] sm:$0xff]
    %v794 = vld [vmem:[#allocation8 + $0x380] sm:$0xff]
    %v795 = vld [vmem:[#allocation8 + $0x388] sm:$0xff]
    %v796 = vld [vmem:[#allocation8 + $0x390] sm:$0xff]
    %v797 = vld [vmem:[#allocation8 + $0x398] sm:$0xff]
    %v798 = vld [vmem:[#allocation8 + $0x3a0] sm:$0xff]
    %v799 = vld [vmem:[#allocation8 + $0x3a8] sm:$0xff]
    %v800 = vld [vmem:[#allocation8 + $0x3b0] sm:$0xff]
    %v801 = vld [vmem:[#allocation8 + $0x3b8] sm:$0xff]
    %v802 = vld [vmem:[#allocation8 + $0x3c0] sm:$0xff]
    %v803 = vld [vmem:[#allocation8 + $0x3c8] sm:$0xff]
    %v804 = vld [vmem:[#allocation8 + $0x3d0] sm:$0xff]
    %v805 = vld [vmem:[#allocation8 + $0x3d8] sm:$0xff]
    %v806 = vld [vmem:[#allocation8 + $0x3e0] sm:$0xff]
    %v807 = vld [vmem:[#allocation8 + $0x3e8] sm:$0xff]
    %v808 = vld [vmem:[#allocation8 + $0x3f0] sm:$0xff]
    %v809 = vld [vmem:[#allocation8 + $0x3f8] sm:$0xff]
    %v810 = vld [vmem:[%s6] sm:$0xf]
    %v812 = vlaneseq
    %v813 = vshrl.u32 %v812, 7
    %v814 = vsub.s32 0, %v813
    %v815 = vrot.slane %v810, %v814
    %v816 = vlaneseq
    %v817 = vshrl.u32 %v816, 7
    %v818 = vsub.s32 1, %v817
    %v819 = vrot.slane %v810, %v818
    %v820 = vlaneseq
    %v821 = vshrl.u32 %v820, 7
    %v822 = vsub.s32 2, %v821
    %v823 = vrot.slane %v810, %v822
    %v824 = vlaneseq
    %v825 = vshrl.u32 %v824, 7
    %v826 = vsub.s32 3, %v825
    %v827 = vrot.slane %v810, %v826
    %v960 = vunpack.c.l.b16 %v682
    %v961 = vunpack.c.h.b16 %v682
    %v962 = vunpack.c.l.b16 %v683
    %v963 = vunpack.c.h.b16 %v683
    %v964 = vunpack.c.l.b16 %v684
    %v965 = vunpack.c.h.b16 %v684
    %v966 = vunpack.c.l.b16 %v685
    %v967 = vunpack.c.h.b16 %v685
    %v968 = vunpack.c.l.b16 %v686
    %v969 = vunpack.c.h.b16 %v686
    %v970 = vunpack.c.l.b16 %v687
    %v971 = vunpack.c.h.b16 %v687
    %v972 = vunpack.c.l.b16 %v688
    %v973 = vunpack.c.h.b16 %v688
    %v974 = vunpack.c.l.b16 %v689
    %v975 = vunpack.c.h.b16 %v689
    %v976 = vunpack.c.l.b16 %v690
    %v977 = vunpack.c.h.b16 %v690
    %v978 = vunpack.c.l.b16 %v691
    %v979 = vunpack.c.h.b16 %v691
    %v980 = vunpack.c.l.b16 %v692
    %v981 = vunpack.c.h.b16 %v692
    %v982 = vunpack.c.l.b16 %v693
    %v983 = vunpack.c.h.b16 %v693
    %v984 = vunpack.c.l.b16 %v694
    %v985 = vunpack.c.h.b16 %v694
    %v986 = vunpack.c.l.b16 %v695
    %v987 = vunpack.c.h.b16 %v695
    %v988 = vunpack.c.l.b16 %v696
    %v989 = vunpack.c.h.b16 %v696
    %v990 = vunpack.c.l.b16 %v697
    %v991 = vunpack.c.h.b16 %v697
    %v992 = vunpack.c.l.b16 %v698
    %v993 = vunpack.c.h.b16 %v698
    %v994 = vunpack.c.l.b16 %v699
    %v995 = vunpack.c.h.b16 %v699
    %v996 = vunpack.c.l.b16 %v700
    %v997 = vunpack.c.h.b16 %v700
    %v998 = vunpack.c.l.b16 %v701
    %v999 = vunpack.c.h.b16 %v701
    %v1000 = vunpack.c.l.b16 %v702
    %v1001 = vunpack.c.h.b16 %v702
    %v1002 = vunpack.c.l.b16 %v703
    %v1003 = vunpack.c.h.b16 %v703
    %v1004 = vunpack.c.l.b16 %v704
    %v1005 = vunpack.c.h.b16 %v704
    %v1006 = vunpack.c.l.b16 %v705
    %v1007 = vunpack.c.h.b16 %v705
    %v1008 = vunpack.c.l.b16 %v706
    %v1009 = vunpack.c.h.b16 %v706
    %v1010 = vunpack.c.l.b16 %v707
    %v1011 = vunpack.c.h.b16 %v707
    %v1012 = vunpack.c.l.b16 %v708
    %v1013 = vunpack.c.h.b16 %v708
    %v1014 = vunpack.c.l.b16 %v709
    %v1015 = vunpack.c.h.b16 %v709
    %v1016 = vunpack.c.l.b16 %v710
    %v1017 = vunpack.c.h.b16 %v710
    %v1018 = vunpack.c.l.b16 %v711
    %v1019 = vunpack.c.h.b16 %v711
    %v1020 = vunpack.c.l.b16 %v712
    %v1021 = vunpack.c.h.b16 %v712
    %v1022 = vunpack.c.l.b16 %v713
    %v1023 = vunpack.c.h.b16 %v713
    %v1024 = vunpack.c.l.b16 %v714
    %v1025 = vunpack.c.h.b16 %v714
    %v1026 = vunpack.c.l.b16 %v715
    %v1027 = vunpack.c.h.b16 %v715
    %v1028 = vunpack.c.l.b16 %v716
    %v1029 = vunpack.c.h.b16 %v716
    %v1030 = vunpack.c.l.b16 %v717
    %v1031 = vunpack.c.h.b16 %v717
    %v1032 = vunpack.c.l.b16 %v718
    %v1033 = vunpack.c.h.b16 %v718
    %v1034 = vunpack.c.l.b16 %v719
    %v1035 = vunpack.c.h.b16 %v719
    %v1036 = vunpack.c.l.b16 %v720
    %v1037 = vunpack.c.h.b16 %v720
    %v1038 = vunpack.c.l.b16 %v721
    %v1039 = vunpack.c.h.b16 %v721
    %v1040 = vunpack.c.l.b16 %v722
    %v1041 = vunpack.c.h.b16 %v722
    %v1042 = vunpack.c.l.b16 %v723
    %v1043 = vunpack.c.h.b16 %v723
    %v1044 = vunpack.c.l.b16 %v724
    %v1045 = vunpack.c.h.b16 %v724
    %v1046 = vunpack.c.l.b16 %v725
    %v1047 = vunpack.c.h.b16 %v725
    %v1048 = vunpack.c.l.b16 %v726
    %v1049 = vunpack.c.h.b16 %v726
    %v1050 = vunpack.c.l.b16 %v727
    %v1051 = vunpack.c.h.b16 %v727
    %v1052 = vunpack.c.l.b16 %v728
    %v1053 = vunpack.c.h.b16 %v728
    %v1054 = vunpack.c.l.b16 %v729
    %v1055 = vunpack.c.h.b16 %v729
    %v1056 = vunpack.c.l.b16 %v730
    %v1057 = vunpack.c.h.b16 %v730
    %v1058 = vunpack.c.l.b16 %v731
    %v1059 = vunpack.c.h.b16 %v731
    %v1060 = vunpack.c.l.b16 %v732
    %v1061 = vunpack.c.h.b16 %v732
    %v1062 = vunpack.c.l.b16 %v733
    %v1063 = vunpack.c.h.b16 %v733
    %v1064 = vunpack.c.l.b16 %v734
    %v1065 = vunpack.c.h.b16 %v734
    %v1066 = vunpack.c.l.b16 %v735
    %v1067 = vunpack.c.h.b16 %v735
    %v1068 = vunpack.c.l.b16 %v736
    %v1069 = vunpack.c.h.b16 %v736
    %v1070 = vunpack.c.l.b16 %v737
    %v1071 = vunpack.c.h.b16 %v737
    %v1072 = vunpack.c.l.b16 %v738
    %v1073 = vunpack.c.h.b16 %v738
    %v1074 = vunpack.c.l.b16 %v739
    %v1075 = vunpack.c.h.b16 %v739
    %v1076 = vunpack.c.l.b16 %v740
    %v1077 = vunpack.c.h.b16 %v740
    %v1078 = vunpack.c.l.b16 %v741
    %v1079 = vunpack.c.h.b16 %v741
    %v1080 = vunpack.c.l.b16 %v742
    %v1081 = vunpack.c.h.b16 %v742
    %v1082 = vunpack.c.l.b16 %v743
    %v1083 = vunpack.c.h.b16 %v743
    %v1084 = vunpack.c.l.b16 %v744
    %v1085 = vunpack.c.h.b16 %v744
    %v1086 = vunpack.c.l.b16 %v745
    %v1087 = vunpack.c.h.b16 %v745
    %v1088 = vunpack.c.l.b16 %v746
    %v1089 = vunpack.c.h.b16 %v746
    %v1090 = vunpack.c.l.b16 %v747
    %v1091 = vunpack.c.h.b16 %v747
    %v1092 = vunpack.c.l.b16 %v748
    %v1093 = vunpack.c.h.b16 %v748
    %v1094 = vunpack.c.l.b16 %v749
    %v1095 = vunpack.c.h.b16 %v749
    %v1096 = vunpack.c.l.b16 %v750
    %v1097 = vunpack.c.h.b16 %v750
    %v1098 = vunpack.c.l.b16 %v751
    %v1099 = vunpack.c.h.b16 %v751
    %v1100 = vunpack.c.l.b16 %v752
    %v1101 = vunpack.c.h.b16 %v752
    %v1102 = vunpack.c.l.b16 %v753
    %v1103 = vunpack.c.h.b16 %v753
    %v1104 = vunpack.c.l.b16 %v754
    %v1105 = vunpack.c.h.b16 %v754
    %v1106 = vunpack.c.l.b16 %v755
    %v1107 = vunpack.c.h.b16 %v755
    %v1108 = vunpack.c.l.b16 %v756
    %v1109 = vunpack.c.h.b16 %v756
    %v1110 = vunpack.c.l.b16 %v757
    %v1111 = vunpack.c.h.b16 %v757
    %v1112 = vunpack.c.l.b16 %v758
    %v1113 = vunpack.c.h.b16 %v758
    %v1114 = vunpack.c.l.b16 %v759
    %v1115 = vunpack.c.h.b16 %v759
    %v1116 = vunpack.c.l.b16 %v760
    %v1117 = vunpack.c.h.b16 %v760
    %v1118 = vunpack.c.l.b16 %v761
    %v1119 = vunpack.c.h.b16 %v761
    %v1120 = vunpack.c.l.b16 %v762
    %v1121 = vunpack.c.h.b16 %v762
    %v1122 = vunpack.c.l.b16 %v763
    %v1123 = vunpack.c.h.b16 %v763
    %v1124 = vunpack.c.l.b16 %v764
    %v1125 = vunpack.c.h.b16 %v764
    %v1126 = vunpack.c.l.b16 %v765
    %v1127 = vunpack.c.h.b16 %v765
    %v1128 = vunpack.c.l.b16 %v766
    %v1129 = vunpack.c.h.b16 %v766
    %v1130 = vunpack.c.l.b16 %v767
    %v1131 = vunpack.c.h.b16 %v767
    %v1132 = vunpack.c.l.b16 %v768
    %v1133 = vunpack.c.h.b16 %v768
    %v1134 = vunpack.c.l.b16 %v769
    %v1135 = vunpack.c.h.b16 %v769
    %v1136 = vunpack.c.l.b16 %v770
    %v1137 = vunpack.c.h.b16 %v770
    %v1138 = vunpack.c.l.b16 %v771
    %v1139 = vunpack.c.h.b16 %v771
    %v1140 = vunpack.c.l.b16 %v772
    %v1141 = vunpack.c.h.b16 %v772
    %v1142 = vunpack.c.l.b16 %v773
    %v1143 = vunpack.c.h.b16 %v773
    %v1144 = vunpack.c.l.b16 %v774
    %v1145 = vunpack.c.h.b16 %v774
    %v1146 = vunpack.c.l.b16 %v775
    %v1147 = vunpack.c.h.b16 %v775
    %v1148 = vunpack.c.l.b16 %v776
    %v1149 = vunpack.c.h.b16 %v776
    %v1150 = vunpack.c.l.b16 %v777
    %v1151 = vunpack.c.h.b16 %v777
    %v1152 = vunpack.c.l.b16 %v778
    %v1153 = vunpack.c.h.b16 %v778
    %v1154 = vunpack.c.l.b16 %v779
    %v1155 = vunpack.c.h.b16 %v779
    %v1156 = vunpack.c.l.b16 %v780
    %v1157 = vunpack.c.h.b16 %v780
    %v1158 = vunpack.c.l.b16 %v781
    %v1159 = vunpack.c.h.b16 %v781
    %v1160 = vunpack.c.l.b16 %v782
    %v1161 = vunpack.c.h.b16 %v782
    %v1162 = vunpack.c.l.b16 %v783
    %v1163 = vunpack.c.h.b16 %v783
    %v1164 = vunpack.c.l.b16 %v784
    %v1165 = vunpack.c.h.b16 %v784
    %v1166 = vunpack.c.l.b16 %v785
    %v1167 = vunpack.c.h.b16 %v785
    %v1168 = vunpack.c.l.b16 %v786
    %v1169 = vunpack.c.h.b16 %v786
    %v1170 = vunpack.c.l.b16 %v787
    %v1171 = vunpack.c.h.b16 %v787
    %v1172 = vunpack.c.l.b16 %v788
    %v1173 = vunpack.c.h.b16 %v788
    %v1174 = vunpack.c.l.b16 %v789
    %v1175 = vunpack.c.h.b16 %v789
    %v1176 = vunpack.c.l.b16 %v790
    %v1177 = vunpack.c.h.b16 %v790
    %v1178 = vunpack.c.l.b16 %v791
    %v1179 = vunpack.c.h.b16 %v791
    %v1180 = vunpack.c.l.b16 %v792
    %v1181 = vunpack.c.h.b16 %v792
    %v1182 = vunpack.c.l.b16 %v793
    %v1183 = vunpack.c.h.b16 %v793
    %v1184 = vunpack.c.l.b16 %v794
    %v1185 = vunpack.c.h.b16 %v794
    %v1186 = vunpack.c.l.b16 %v795
    %v1187 = vunpack.c.h.b16 %v795
    %v1188 = vunpack.c.l.b16 %v796
    %v1189 = vunpack.c.h.b16 %v796
    %v1190 = vunpack.c.l.b16 %v797
    %v1191 = vunpack.c.h.b16 %v797
    %v1192 = vunpack.c.l.b16 %v798
    %v1193 = vunpack.c.h.b16 %v798
    %v1194 = vunpack.c.l.b16 %v799
    %v1195 = vunpack.c.h.b16 %v799
    %v1196 = vunpack.c.l.b16 %v800
    %v1197 = vunpack.c.h.b16 %v800
    %v1198 = vunpack.c.l.b16 %v801
    %v1199 = vunpack.c.h.b16 %v801
    %v1200 = vunpack.c.l.b16 %v802
    %v1201 = vunpack.c.h.b16 %v802
    %v1202 = vunpack.c.l.b16 %v803
    %v1203 = vunpack.c.h.b16 %v803
    %v1204 = vunpack.c.l.b16 %v804
    %v1205 = vunpack.c.h.b16 %v804
    %v1206 = vunpack.c.l.b16 %v805
    %v1207 = vunpack.c.h.b16 %v805
    %v1208 = vunpack.c.l.b16 %v806
    %v1209 = vunpack.c.h.b16 %v806
    %v1210 = vunpack.c.l.b16 %v807
    %v1211 = vunpack.c.h.b16 %v807
    %v1212 = vunpack.c.l.b16 %v808
    %v1213 = vunpack.c.h.b16 %v808
    %v1214 = vunpack.c.l.b16 %v809
    %v1215 = vunpack.c.h.b16 %v809
    %v1216 = vpack.c.b16 %v964, %v960
    %v1217 = vpack.c.b16 %v965, %v961
    %v1218 = vpack.c.b16 %v966, %v962
    %v1219 = vpack.c.b16 %v967, %v963
    %v1220 = vpack.c.b16 %v972, %v968
    %v1221 = vpack.c.b16 %v973, %v969
    %v1222 = vpack.c.b16 %v974, %v970
    %v1223 = vpack.c.b16 %v975, %v971
    %v1224 = vpack.c.b16 %v980, %v976
    %v1225 = vpack.c.b16 %v981, %v977
    %v1226 = vpack.c.b16 %v982, %v978
    %v1227 = vpack.c.b16 %v983, %v979
    %v1228 = vpack.c.b16 %v988, %v984
    %v1229 = vpack.c.b16 %v989, %v985
    %v1230 = vpack.c.b16 %v990, %v986
    %v1231 = vpack.c.b16 %v991, %v987
    %v1232 = vpack.c.b16 %v996, %v992
    %v1233 = vpack.c.b16 %v997, %v993
    %v1234 = vpack.c.b16 %v998, %v994
    %v1235 = vpack.c.b16 %v999, %v995
    %v1236 = vpack.c.b16 %v1004, %v1000
    %v1237 = vpack.c.b16 %v1005, %v1001
    %v1238 = vpack.c.b16 %v1006, %v1002
    %v1239 = vpack.c.b16 %v1007, %v1003
    %v1240 = vpack.c.b16 %v1012, %v1008
    %v1241 = vpack.c.b16 %v1013, %v1009
    %v1242 = vpack.c.b16 %v1014, %v1010
    %v1243 = vpack.c.b16 %v1015, %v1011
    %v1244 = vpack.c.b16 %v1020, %v1016
    %v1245 = vpack.c.b16 %v1021, %v1017
    %v1246 = vpack.c.b16 %v1022, %v1018
    %v1247 = vpack.c.b16 %v1023, %v1019
    %v1248 = vpack.c.b16 %v1028, %v1024
    %v1249 = vpack.c.b16 %v1029, %v1025
    %v1250 = vpack.c.b16 %v1030, %v1026
    %v1251 = vpack.c.b16 %v1031, %v1027
    %v1252 = vpack.c.b16 %v1036, %v1032
    %v1253 = vpack.c.b16 %v1037, %v1033
    %v1254 = vpack.c.b16 %v1038, %v1034
    %v1255 = vpack.c.b16 %v1039, %v1035
    %v1256 = vpack.c.b16 %v1044, %v1040
    %v1257 = vpack.c.b16 %v1045, %v1041
    %v1258 = vpack.c.b16 %v1046, %v1042
    %v1259 = vpack.c.b16 %v1047, %v1043
    %v1260 = vpack.c.b16 %v1052, %v1048
    %v1261 = vpack.c.b16 %v1053, %v1049
    %v1262 = vpack.c.b16 %v1054, %v1050
    %v1263 = vpack.c.b16 %v1055, %v1051
    %v1264 = vpack.c.b16 %v1060, %v1056
    %v1265 = vpack.c.b16 %v1061, %v1057
    %v1266 = vpack.c.b16 %v1062, %v1058
    %v1267 = vpack.c.b16 %v1063, %v1059
    %v1268 = vpack.c.b16 %v1068, %v1064
    %v1269 = vpack.c.b16 %v1069, %v1065
    %v1270 = vpack.c.b16 %v1070, %v1066
    %v1271 = vpack.c.b16 %v1071, %v1067
    %v1272 = vpack.c.b16 %v1076, %v1072
    %v1273 = vpack.c.b16 %v1077, %v1073
    %v1274 = vpack.c.b16 %v1078, %v1074
    %v1275 = vpack.c.b16 %v1079, %v1075
    %v1276 = vpack.c.b16 %v1084, %v1080
    %v1277 = vpack.c.b16 %v1085, %v1081
    %v1278 = vpack.c.b16 %v1086, %v1082
    %v1279 = vpack.c.b16 %v1087, %v1083
    %v1280 = vpack.c.b16 %v1092, %v1088
    %v1281 = vpack.c.b16 %v1093, %v1089
    %v1282 = vpack.c.b16 %v1094, %v1090
    %v1283 = vpack.c.b16 %v1095, %v1091
    %v1284 = vpack.c.b16 %v1100, %v1096
    %v1285 = vpack.c.b16 %v1101, %v1097
    %v1286 = vpack.c.b16 %v1102, %v1098
    %v1287 = vpack.c.b16 %v1103, %v1099
    %v1288 = vpack.c.b16 %v1108, %v1104
    %v1289 = vpack.c.b16 %v1109, %v1105
    %v1290 = vpack.c.b16 %v1110, %v1106
    %v1291 = vpack.c.b16 %v1111, %v1107
    %v1292 = vpack.c.b16 %v1116, %v1112
    %v1293 = vpack.c.b16 %v1117, %v1113
    %v1294 = vpack.c.b16 %v1118, %v1114
    %v1295 = vpack.c.b16 %v1119, %v1115
    %v1296 = vpack.c.b16 %v1124, %v1120
    %v1297 = vpack.c.b16 %v1125, %v1121
    %v1298 = vpack.c.b16 %v1126, %v1122
    %v1299 = vpack.c.b16 %v1127, %v1123
    %v1300 = vpack.c.b16 %v1132, %v1128
    %v1301 = vpack.c.b16 %v1133, %v1129
    %v1302 = vpack.c.b16 %v1134, %v1130
    %v1303 = vpack.c.b16 %v1135, %v1131
    %v1304 = vpack.c.b16 %v1140, %v1136
    %v1305 = vpack.c.b16 %v1141, %v1137
    %v1306 = vpack.c.b16 %v1142, %v1138
    %v1307 = vpack.c.b16 %v1143, %v1139
    %v1308 = vpack.c.b16 %v1148, %v1144
    %v1309 = vpack.c.b16 %v1149, %v1145
    %v1310 = vpack.c.b16 %v1150, %v1146
    %v1311 = vpack.c.b16 %v1151, %v1147
    %v1312 = vpack.c.b16 %v1156, %v1152
    %v1313 = vpack.c.b16 %v1157, %v1153
    %v1314 = vpack.c.b16 %v1158, %v1154
    %v1315 = vpack.c.b16 %v1159, %v1155
    %v1316 = vpack.c.b16 %v1164, %v1160
    %v1317 = vpack.c.b16 %v1165, %v1161
    %v1318 = vpack.c.b16 %v1166, %v1162
    %v1319 = vpack.c.b16 %v1167, %v1163
    %v1320 = vpack.c.b16 %v1172, %v1168
    %v1321 = vpack.c.b16 %v1173, %v1169
    %v1322 = vpack.c.b16 %v1174, %v1170
    %v1323 = vpack.c.b16 %v1175, %v1171
    %v1324 = vpack.c.b16 %v1180, %v1176
    %v1325 = vpack.c.b16 %v1181, %v1177
    %v1326 = vpack.c.b16 %v1182, %v1178
    %v1327 = vpack.c.b16 %v1183, %v1179
    %v1328 = vpack.c.b16 %v1188, %v1184
    %v1329 = vpack.c.b16 %v1189, %v1185
    %v1330 = vpack.c.b16 %v1190, %v1186
    %v1331 = vpack.c.b16 %v1191, %v1187
    %v1332 = vpack.c.b16 %v1196, %v1192
    %v1333 = vpack.c.b16 %v1197, %v1193
    %v1334 = vpack.c.b16 %v1198, %v1194
    %v1335 = vpack.c.b16 %v1199, %v1195
    %v1336 = vpack.c.b16 %v1204, %v1200
    %v1337 = vpack.c.b16 %v1205, %v1201
    %v1338 = vpack.c.b16 %v1206, %v1202
    %v1339 = vpack.c.b16 %v1207, %v1203
    %v1340 = vpack.c.b16 %v1212, %v1208
    %v1341 = vpack.c.b16 %v1213, %v1209
    %v1342 = vpack.c.b16 %v1214, %v1210
    %v1343 = vpack.c.b16 %v1215, %v1211
    %1472 = vmatprep.subr.bf16.mxu0 %v1217
    %1473 = vmatpush1.bf16.msra.mxu0 %v1216
    %1474 = vmatprep.subr.bf16.mxu0 %v1221
    %1475 = vmatpush1.bf16.msra.mxu0 %v1220
    %1476 = vmatprep.subr.bf16.mxu0 %v1225
    %1477 = vmatpush1.bf16.msra.mxu0 %v1224
    %1478 = vmatprep.subr.bf16.mxu0 %v1229
    %1479 = vmatpush1.bf16.msra.mxu0 %v1228
    %1480 = vmatprep.subr.bf16.mxu0 %v1233
    %1481 = vmatpush1.bf16.msra.mxu0 %v1232
    %1482 = vmatprep.subr.bf16.mxu0 %v1237
    %1483 = vmatpush1.bf16.msra.mxu0 %v1236
    %1484 = vmatprep.subr.bf16.mxu0 %v1241
    %1485 = vmatpush1.bf16.msra.mxu0 %v1240
    %1486 = vmatprep.subr.bf16.mxu0 %v1245
    %1487 = vmatpush1.bf16.msra.mxu0 %v1244
    %1488 = vmatprep.subr.bf16.mxu0 %v1249
    %1489 = vmatpush1.bf16.msra.mxu0 %v1248
    %1490 = vmatprep.subr.bf16.mxu0 %v1253
    %1491 = vmatpush1.bf16.msra.mxu0 %v1252
    %1492 = vmatprep.subr.bf16.mxu0 %v1257
    %1493 = vmatpush1.bf16.msra.mxu0 %v1256
    %1494 = vmatprep.subr.bf16.mxu0 %v1261
    %1495 = vmatpush1.bf16.msra.mxu0 %v1260
    %1496 = vmatprep.subr.bf16.mxu0 %v1265
    %1497 = vmatpush1.bf16.msra.mxu0 %v1264
    %1498 = vmatprep.subr.bf16.mxu0 %v1269
    %1499 = vmatpush1.bf16.msra.mxu0 %v1268
    %1500 = vmatprep.subr.bf16.mxu0 %v1273
    %1501 = vmatpush1.bf16.msra.mxu0 %v1272
    %1502 = vmatprep.subr.bf16.mxu0 %v1277
    %1503 = vmatpush1.bf16.msra.mxu0 %v1276
    %1504 = vmatprep.mubr.bf16.mxu0 %v679
    %1505 = vmatmul.mubr.bf16.gmra.mrb[0].mxu0 %v678
    %v1506 = vpop.f32.mrb[0].mxu0
    %v1507 = vadd.f32 %v815, %v1506
    %v1508 = vpop.f32.mrb[0].mxu0
    %v1509 = vadd.f32 %v819, %v1508
    %v1510 = vpop.f32.mrb[0].mxu0
    %v1511 = vpop.f32.mrb[0].mxu0
    %1512 = vdwg.mxu0
    %1513 = vmatprep.subr.bf16.mxu0 %v1281
    %1514 = vmatpush1.bf16.msra.mxu0 %v1280
    %1515 = vmatprep.subr.bf16.mxu0 %v1285
    %1516 = vmatpush1.bf16.msra.mxu0 %v1284
    %1517 = vmatprep.subr.bf16.mxu0 %v1289
    %1518 = vmatpush1.bf16.msra.mxu0 %v1288
    %1519 = vmatprep.subr.bf16.mxu0 %v1293
    %1520 = vmatpush1.bf16.msra.mxu0 %v1292
    %1521 = vmatprep.subr.bf16.mxu0 %v1297
    %1522 = vmatpush1.bf16.msra.mxu0 %v1296
    %1523 = vmatprep.subr.bf16.mxu0 %v1301
    %1524 = vmatpush1.bf16.msra.mxu0 %v1300
    %1525 = vmatprep.subr.bf16.mxu0 %v1305
    %1526 = vmatpush1.bf16.msra.mxu0 %v1304
    %1527 = vmatprep.subr.bf16.mxu0 %v1309
    %1528 = vmatpush1.bf16.msra.mxu0 %v1308
    %1529 = vmatprep.subr.bf16.mxu0 %v1313
    %1530 = vmatpush1.bf16.msra.mxu0 %v1312
    %1531 = vmatprep.subr.bf16.mxu0 %v1317
    %1532 = vmatpush1.bf16.msra.mxu0 %v1316
    %1533 = vmatprep.subr.bf16.mxu0 %v1321
    %1534 = vmatpush1.bf16.msra.mxu0 %v1320
    %1535 = vmatprep.subr.bf16.mxu0 %v1325
    %1536 = vmatpush1.bf16.msra.mxu0 %v1324
    %1537 = vmatprep.subr.bf16.mxu0 %v1329
    %1538 = vmatpush1.bf16.msra.mxu0 %v1328
    %1539 = vmatprep.subr.bf16.mxu0 %v1333
    %1540 = vmatpush1.bf16.msra.mxu0 %v1332
    %1541 = vmatprep.subr.bf16.mxu0 %v1337
    %1542 = vmatpush1.bf16.msra.mxu0 %v1336
    %1543 = vmatprep.subr.bf16.mxu0 %v1341
    %1544 = vmatpush1.bf16.msra.mxu0 %v1340
    %1545 = vmatprep.mubr.bf16.mxu0 %v681
    %1546 = vmatmul.mubr.bf16.gmra.mrb[0].mxu0 %v680
    %v1547 = vpop.f32.mrb[0].mxu0
    %v1548 = vadd.f32 %v1507, %v1547
    %v1549 = vpop.f32.mrb[0].mxu0
    %v1550 = vadd.f32 %v1509, %v1549
    %v1551 = vpop.f32.mrb[0].mxu0
    %v1552 = vpop.f32.mrb[0].mxu0
    %1553 = vdwg.mxu0
    %1554 = vmatprep.subr.bf16.mxu0 %v1219
    %1555 = vmatpush1.bf16.msra.mxu0 %v1218
    %1556 = vmatprep.subr.bf16.mxu0 %v1223
    %1557 = vmatpush1.bf16.msra.mxu0 %v1222
    %1558 = vmatprep.subr.bf16.mxu0 %v1227
    %1559 = vmatpush1.bf16.msra.mxu0 %v1226
    %1560 = vmatprep.subr.bf16.mxu0 %v1231
    %1561 = vmatpush1.bf16.msra.mxu0 %v1230
    %1562 = vmatprep.subr.bf16.mxu0 %v1235
    %1563 = vmatpush1.bf16.msra.mxu0 %v1234
    %1564 = vmatprep.subr.bf16.mxu0 %v1239
    %1565 = vmatpush1.bf16.msra.mxu0 %v1238
    %1566 = vmatprep.subr.bf16.mxu0 %v1243
    %1567 = vmatpush1.bf16.msra.mxu0 %v1242
    %1568 = vmatprep.subr.bf16.mxu0 %v1247
    %1569 = vmatpush1.bf16.msra.mxu0 %v1246
    %1570 = vmatprep.subr.bf16.mxu0 %v1251
    %1571 = vmatpush1.bf16.msra.mxu0 %v1250
    %1572 = vmatprep.subr.bf16.mxu0 %v1255
    %1573 = vmatpush1.bf16.msra.mxu0 %v1254
    %1574 = vmatprep.subr.bf16.mxu0 %v1259
    %1575 = vmatpush1.bf16.msra.mxu0 %v1258
    %1576 = vmatprep.subr.bf16.mxu0 %v1263
    %1577 = vmatpush1.bf16.msra.mxu0 %v1262
    %1578 = vmatprep.subr.bf16.mxu0 %v1267
    %1579 = vmatpush1.bf16.msra.mxu0 %v1266
    %1580 = vmatprep.subr.bf16.mxu0 %v1271
    %1581 = vmatpush1.bf16.msra.mxu0 %v1270
    %1582 = vmatprep.subr.bf16.mxu0 %v1275
    %1583 = vmatpush1.bf16.msra.mxu0 %v1274
    %1584 = vmatprep.subr.bf16.mxu0 %v1279
    %1585 = vmatpush1.bf16.msra.mxu0 %v1278
    %1586 = vmatprep.mubr.bf16.mxu0 %v679
    %1587 = vmatmul.mubr.bf16.gmra.mrb[0].mxu0 %v678
    %v1588 = vpop.f32.mrb[0].mxu0
    %v1589 = vadd.f32 %v823, %v1588
    %v1590 = vpop.f32.mrb[0].mxu0
    %v1591 = vadd.f32 %v827, %v1590
    %v1592 = vpop.f32.mrb[0].mxu0
    %v1593 = vpop.f32.mrb[0].mxu0
    %1594 = vdwg.mxu0
    %1595 = vmatprep.subr.bf16.mxu0 %v1283
    %1596 = vmatpush1.bf16.msra.mxu0 %v1282
    %1597 = vmatprep.subr.bf16.mxu0 %v1287
    %1598 = vmatpush1.bf16.msra.mxu0 %v1286
    %1599 = vmatprep.subr.bf16.mxu0 %v1291
    %1600 = vmatpush1.bf16.msra.mxu0 %v1290
    %1601 = vmatprep.subr.bf16.mxu0 %v1295
    %1602 = vmatpush1.bf16.msra.mxu0 %v1294
    %1603 = vmatprep.subr.bf16.mxu0 %v1299
    %1604 = vmatpush1.bf16.msra.mxu0 %v1298
    %1605 = vmatprep.subr.bf16.mxu0 %v1303
    %1606 = vmatpush1.bf16.msra.mxu0 %v1302
    %1607 = vmatprep.subr.bf16.mxu0 %v1307
    %1608 = vmatpush1.bf16.msra.mxu0 %v1306
    %1609 = vmatprep.subr.bf16.mxu0 %v1311
    %1610 = vmatpush1.bf16.msra.mxu0 %v1310
    %1611 = vmatprep.subr.bf16.mxu0 %v1315
    %1612 = vmatpush1.bf16.msra.mxu0 %v1314
    %1613 = vmatprep.subr.bf16.mxu0 %v1319
    %1614 = vmatpush1.bf16.msra.mxu0 %v1318
    %1615 = vmatprep.subr.bf16.mxu0 %v1323
    %1616 = vmatpush1.bf16.msra.mxu0 %v1322
    %1617 = vmatprep.subr.bf16.mxu0 %v1327
    %1618 = vmatpush1.bf16.msra.mxu0 %v1326
    %1619 = vmatprep.subr.bf16.mxu0 %v1331
    %1620 = vmatpush1.bf16.msra.mxu0 %v1330
    %1621 = vmatprep.subr.bf16.mxu0 %v1335
    %1622 = vmatpush1.bf16.msra.mxu0 %v1334
    %1623 = vmatprep.subr.bf16.mxu0 %v1339
    %1624 = vmatpush1.bf16.msra.mxu0 %v1338
    %1625 = vmatprep.subr.bf16.mxu0 %v1343
    %1626 = vmatpush1.bf16.msra.mxu0 %v1342
    %1627 = vmatprep.mubr.bf16.mxu0 %v681
    %1628 = vmatmul.mubr.bf16.gmra.mrb[0].mxu0 %v680
    %v1629 = vpop.f32.mrb[0].mxu0
    %v1630 = vadd.f32 %v1589, %v1629
    %v1631 = vpop.f32.mrb[0].mxu0
    %v1632 = vadd.f32 %v1591, %v1631
    %v1633 = vpop.f32.mrb[0].mxu0
    %v1634 = vpop.f32.mrb[0].mxu0
    %1635 = vdwg.mxu0
    %v1636 = vmax.f32 %v1548, 0.0
    %v1637 = vmax.f32 %v1550, 0.0
    %v1638 = vmax.f32 %v1630, 0.0
    %v1639 = vmax.f32 %v1632, 0.0
    %v1640 = vpack.c.bf16 %v1636, %v1636
    %v1641 = vpack.c.bf16 %v1637, %v1637
    %v1642 = vpack.c.bf16 %v1638, %v1638
    %v1643 = vpack.c.bf16 %v1639, %v1639
    %v1644 = vld [vmem:[#allocation10] sm:$0xf]
    %v1645 = vld [vmem:[#allocation10 + $0x4] sm:$0xf]
    %v1646 = vld [vmem:[#allocation10 + $0x8] sm:$0xf]
    %v1647 = vld [vmem:[#allocation10 + $0xc] sm:$0xf]
    %v1648 = vld [vmem:[#allocation10 + $0x10] sm:$0xf]
    %v1649 = vld [vmem:[#allocation10 + $0x14] sm:$0xf]
    %v1650 = vld [vmem:[#allocation10 + $0x18] sm:$0xf]
    %v1651 = vld [vmem:[#allocation10 + $0x1c] sm:$0xf]
    %v1652 = vld [vmem:[#allocation10 + $0x20] sm:$0xf]
    %v1653 = vld [vmem:[#allocation10 + $0x24] sm:$0xf]
    %v1654 = vld [vmem:[#allocation10 + $0x28] sm:$0xf]
    %v1655 = vld [vmem:[#allocation10 + $0x2c] sm:$0xf]
    %v1656 = vld [vmem:[#allocation10 + $0x30] sm:$0xf]
    %v1657 = vld [vmem:[#allocation10 + $0x34] sm:$0xf]
    %v1658 = vld [vmem:[#allocation10 + $0x38] sm:$0xf]
    %v1659 = vld [vmem:[#allocation10 + $0x3c] sm:$0xf]
    %v1660 = vld [vmem:[#allocation10 + $0x40] sm:$0xf]
    %v1661 = vld [vmem:[#allocation10 + $0x44] sm:$0xf]
    %v1662 = vld [vmem:[#allocation10 + $0x48] sm:$0xf]
    %v1663 = vld [vmem:[#allocation10 + $0x4c] sm:$0xf]
    %v1664 = vld [vmem:[#allocation10 + $0x50] sm:$0xf]
    %v1665 = vld [vmem:[#allocation10 + $0x54] sm:$0xf]
    %v1666 = vld [vmem:[#allocation10 + $0x58] sm:$0xf]
    %v1667 = vld [vmem:[#allocation10 + $0x5c] sm:$0xf]
    %v1668 = vld [vmem:[#allocation10 + $0x60] sm:$0xf]
    %v1669 = vld [vmem:[#allocation10 + $0x64] sm:$0xf]
    %v1670 = vld [vmem:[#allocation10 + $0x68] sm:$0xf]
    %v1671 = vld [vmem:[#allocation10 + $0x6c] sm:$0xf]
    %v1672 = vld [vmem:[#allocation10 + $0x70] sm:$0xf]
    %v1673 = vld [vmem:[#allocation10 + $0x74] sm:$0xf]
    %v1674 = vld [vmem:[#allocation10 + $0x78] sm:$0xf]
    %v1675 = vld [vmem:[#allocation10 + $0x7c] sm:$0xf]
    %v1676 = vld [vmem:[#allocation10 + $0x80] sm:$0xf]
    %v1677 = vld [vmem:[#allocation10 + $0x84] sm:$0xf]
    %v1678 = vld [vmem:[#allocation10 + $0x88] sm:$0xf]
    %v1679 = vld [vmem:[#allocation10 + $0x8c] sm:$0xf]
    %v1680 = vld [vmem:[#allocation10 + $0x90] sm:$0xf]
    %v1681 = vld [vmem:[#allocation10 + $0x94] sm:$0xf]
    %v1682 = vld [vmem:[#allocation10 + $0x98] sm:$0xf]
    %v1683 = vld [vmem:[#allocation10 + $0x9c] sm:$0xf]
    %v1684 = vld [vmem:[#allocation10 + $0xa0] sm:$0xf]
    %v1685 = vld [vmem:[#allocation10 + $0xa4] sm:$0xf]
    %v1686 = vld [vmem:[#allocation10 + $0xa8] sm:$0xf]
    %v1687 = vld [vmem:[#allocation10 + $0xac] sm:$0xf]
    %v1688 = vld [vmem:[#allocation10 + $0xb0] sm:$0xf]
    %v1689 = vld [vmem:[#allocation10 + $0xb4] sm:$0xf]
    %v1690 = vld [vmem:[#allocation10 + $0xb8] sm:$0xf]
    %v1691 = vld [vmem:[#allocation10 + $0xbc] sm:$0xf]
    %v1692 = vld [vmem:[#allocation10 + $0xc0] sm:$0xf]
    %v1693 = vld [vmem:[#allocation10 + $0xc4] sm:$0xf]
    %v1694 = vld [vmem:[#allocation10 + $0xc8] sm:$0xf]
    %v1695 = vld [vmem:[#allocation10 + $0xcc] sm:$0xf]
    %v1696 = vld [vmem:[#allocation10 + $0xd0] sm:$0xf]
    %v1697 = vld [vmem:[#allocation10 + $0xd4] sm:$0xf]
    %v1698 = vld [vmem:[#allocation10 + $0xd8] sm:$0xf]
    %v1699 = vld [vmem:[#allocation10 + $0xdc] sm:$0xf]
    %v1700 = vld [vmem:[#allocation10 + $0xe0] sm:$0xf]
    %v1701 = vld [vmem:[#allocation10 + $0xe4] sm:$0xf]
    %v1702 = vld [vmem:[#allocation10 + $0xe8] sm:$0xf]
    %v1703 = vld [vmem:[#allocation10 + $0xec] sm:$0xf]
    %v1704 = vld [vmem:[#allocation10 + $0xf0] sm:$0xf]
    %v1705 = vld [vmem:[#allocation10 + $0xf4] sm:$0xf]
    %v1706 = vld [vmem:[#allocation10 + $0xf8] sm:$0xf]
    %v1707 = vld [vmem:[#allocation10 + $0xfc] sm:$0xf]
    %v1708 = vld [vmem:[%s8] sm:$0x1]
    %v1710 = vlaneseq
    %v1711 = vshrl.u32 %v1710, 7
    %v1712 = vsub.s32 0, %v1711
    %v1713 = vrot.slane %v1708, %v1712
    %v1779 = vunpack.c.l.b16 %v1644
    %v1780 = vunpack.c.l.b16 %v1645
    %v1781 = vunpack.c.l.b16 %v1646
    %v1782 = vunpack.c.l.b16 %v1647
    %v1783 = vunpack.c.l.b16 %v1648
    %v1784 = vunpack.c.l.b16 %v1649
    %v1785 = vunpack.c.l.b16 %v1650
    %v1786 = vunpack.c.l.b16 %v1651
    %v1787 = vunpack.c.l.b16 %v1652
    %v1788 = vunpack.c.l.b16 %v1653
    %v1789 = vunpack.c.l.b16 %v1654
    %v1790 = vunpack.c.l.b16 %v1655
    %v1791 = vunpack.c.l.b16 %v1656
    %v1792 = vunpack.c.l.b16 %v1657
    %v1793 = vunpack.c.l.b16 %v1658
    %v1794 = vunpack.c.l.b16 %v1659
    %v1795 = vunpack.c.l.b16 %v1660
    %v1796 = vunpack.c.l.b16 %v1661
    %v1797 = vunpack.c.l.b16 %v1662
    %v1798 = vunpack.c.l.b16 %v1663
    %v1799 = vunpack.c.l.b16 %v1664
    %v1800 = vunpack.c.l.b16 %v1665
    %v1801 = vunpack.c.l.b16 %v1666
    %v1802 = vunpack.c.l.b16 %v1667
    %v1803 = vunpack.c.l.b16 %v1668
    %v1804 = vunpack.c.l.b16 %v1669
    %v1805 = vunpack.c.l.b16 %v1670
    %v1806 = vunpack.c.l.b16 %v1671
    %v1807 = vunpack.c.l.b16 %v1672
    %v1808 = vunpack.c.l.b16 %v1673
    %v1809 = vunpack.c.l.b16 %v1674
    %v1810 = vunpack.c.l.b16 %v1675
    %v1811 = vunpack.c.l.b16 %v1676
    %v1812 = vunpack.c.l.b16 %v1677
    %v1813 = vunpack.c.l.b16 %v1678
    %v1814 = vunpack.c.l.b16 %v1679
    %v1815 = vunpack.c.l.b16 %v1680
    %v1816 = vunpack.c.l.b16 %v1681
    %v1817 = vunpack.c.l.b16 %v1682
    %v1818 = vunpack.c.l.b16 %v1683
    %v1819 = vunpack.c.l.b16 %v1684
    %v1820 = vunpack.c.l.b16 %v1685
    %v1821 = vunpack.c.l.b16 %v1686
    %v1822 = vunpack.c.l.b16 %v1687
    %v1823 = vunpack.c.l.b16 %v1688
    %v1824 = vunpack.c.l.b16 %v1689
    %v1825 = vunpack.c.l.b16 %v1690
    %v1826 = vunpack.c.l.b16 %v1691
    %v1827 = vunpack.c.l.b16 %v1692
    %v1828 = vunpack.c.l.b16 %v1693
    %v1829 = vunpack.c.l.b16 %v1694
    %v1830 = vunpack.c.l.b16 %v1695
    %v1831 = vunpack.c.l.b16 %v1696
    %v1832 = vunpack.c.l.b16 %v1697
    %v1833 = vunpack.c.l.b16 %v1698
    %v1834 = vunpack.c.l.b16 %v1699
    %v1835 = vunpack.c.l.b16 %v1700
    %v1836 = vunpack.c.l.b16 %v1701
    %v1837 = vunpack.c.l.b16 %v1702
    %v1838 = vunpack.c.l.b16 %v1703
    %v1839 = vunpack.c.l.b16 %v1704
    %v1840 = vunpack.c.l.b16 %v1705
    %v1841 = vunpack.c.l.b16 %v1706
    %v1842 = vunpack.c.l.b16 %v1707
    %v1843 = vpack.c.b16 %v1780, %v1779
    %v1844 = vpack.c.b16 %v1782, %v1781
    %v1845 = vpack.c.b16 %v1784, %v1783
    %v1846 = vpack.c.b16 %v1786, %v1785
    %v1847 = vpack.c.b16 %v1788, %v1787
    %v1848 = vpack.c.b16 %v1790, %v1789
    %v1849 = vpack.c.b16 %v1792, %v1791
    %v1850 = vpack.c.b16 %v1794, %v1793
    %v1851 = vpack.c.b16 %v1796, %v1795
    %v1852 = vpack.c.b16 %v1798, %v1797
    %v1853 = vpack.c.b16 %v1800, %v1799
    %v1854 = vpack.c.b16 %v1802, %v1801
    %v1855 = vpack.c.b16 %v1804, %v1803
    %v1856 = vpack.c.b16 %v1806, %v1805
    %v1857 = vpack.c.b16 %v1808, %v1807
    %v1858 = vpack.c.b16 %v1810, %v1809
    %v1859 = vpack.c.b16 %v1812, %v1811
    %v1860 = vpack.c.b16 %v1814, %v1813
    %v1861 = vpack.c.b16 %v1816, %v1815
    %v1862 = vpack.c.b16 %v1818, %v1817
    %v1863 = vpack.c.b16 %v1820, %v1819
    %v1864 = vpack.c.b16 %v1822, %v1821
    %v1865 = vpack.c.b16 %v1824, %v1823
    %v1866 = vpack.c.b16 %v1826, %v1825
    %v1867 = vpack.c.b16 %v1828, %v1827
    %v1868 = vpack.c.b16 %v1830, %v1829
    %v1869 = vpack.c.b16 %v1832, %v1831
    %v1870 = vpack.c.b16 %v1834, %v1833
    %v1871 = vpack.c.b16 %v1836, %v1835
    %v1872 = vpack.c.b16 %v1838, %v1837
    %v1873 = vpack.c.b16 %v1840, %v1839
    %v1874 = vpack.c.b16 %v1842, %v1841
    %1907 = vmatprep.subr.bf16.mxu0 0
    %1908 = vmatpush1.bf16.msra.mxu0 %v1843
    %1909 = vmatprep.subr.bf16.mxu0 0
    %1910 = vmatpush1.bf16.msra.mxu0 %v1844
    %1911 = vmatprep.subr.bf16.mxu0 0
    %1912 = vmatpush1.bf16.msra.mxu0 %v1845
    %1913 = vmatprep.subr.bf16.mxu0 0
    %1914 = vmatpush1.bf16.msra.mxu0 %v1846
    %1915 = vmatprep.subr.bf16.mxu0 0
    %1916 = vmatpush1.bf16.msra.mxu0 %v1847
    %1917 = vmatprep.subr.bf16.mxu0 0
    %1918 = vmatpush1.bf16.msra.mxu0 %v1848
    %1919 = vmatprep.subr.bf16.mxu0 0
    %1920 = vmatpush1.bf16.msra.mxu0 %v1849
    %1921 = vmatprep.subr.bf16.mxu0 0
    %1922 = vmatpush1.bf16.msra.mxu0 %v1850
    %1923 = vmatprep.subr.bf16.mxu0 0
    %1924 = vmatpush1.bf16.msra.mxu0 %v1851
    %1925 = vmatprep.subr.bf16.mxu0 0
    %1926 = vmatpush1.bf16.msra.mxu0 %v1852
    %1927 = vmatprep.subr.bf16.mxu0 0
    %1928 = vmatpush1.bf16.msra.mxu0 %v1853
    %1929 = vmatprep.subr.bf16.mxu0 0
    %1930 = vmatpush1.bf16.msra.mxu0 %v1854
    %1931 = vmatprep.subr.bf16.mxu0 0
    %1932 = vmatpush1.bf16.msra.mxu0 %v1855
    %1933 = vmatprep.subr.bf16.mxu0 0
    %1934 = vmatpush1.bf16.msra.mxu0 %v1856
    %1935 = vmatprep.subr.bf16.mxu0 0
    %1936 = vmatpush1.bf16.msra.mxu0 %v1857
    %1937 = vmatprep.subr.bf16.mxu0 0
    %1938 = vmatpush1.bf16.msra.mxu0 %v1858
    %1939 = vmatprep.mubr.bf16.mxu0 %v1641
    %1940 = vmatmul.mubr.bf16.gmra.mrb[0].mxu0 %v1640
    %v1941 = vpop.f32.mrb[0].mxu0
    %v1942 = vadd.f32 %v1713, %v1941
    %v1943 = vpop.f32.mrb[0].mxu0
    %v1944 = vpop.f32.mrb[0].mxu0
    %v1945 = vpop.f32.mrb[0].mxu0
    %1946 = vdwg.mxu0
    %1947 = vmatprep.subr.bf16.mxu0 0
    %1948 = vmatpush1.bf16.msra.mxu0 %v1859
    %1949 = vmatprep.subr.bf16.mxu0 0
    %1950 = vmatpush1.bf16.msra.mxu0 %v1860
    %1951 = vmatprep.subr.bf16.mxu0 0
    %1952 = vmatpush1.bf16.msra.mxu0 %v1861
    %1953 = vmatprep.subr.bf16.mxu0 0
    %1954 = vmatpush1.bf16.msra.mxu0 %v1862
    %1955 = vmatprep.subr.bf16.mxu0 0
    %1956 = vmatpush1.bf16.msra.mxu0 %v1863
    %1957 = vmatprep.subr.bf16.mxu0 0
    %1958 = vmatpush1.bf16.msra.mxu0 %v1864
    %1959 = vmatprep.subr.bf16.mxu0 0
    %1960 = vmatpush1.bf16.msra.mxu0 %v1865
    %1961 = vmatprep.subr.bf16.mxu0 0
    %1962 = vmatpush1.bf16.msra.mxu0 %v1866
    %1963 = vmatprep.subr.bf16.mxu0 0
    %1964 = vmatpush1.bf16.msra.mxu0 %v1867
    %1965 = vmatprep.subr.bf16.mxu0 0
    %1966 = vmatpush1.bf16.msra.mxu0 %v1868
    %1967 = vmatprep.subr.bf16.mxu0 0
    %1968 = vmatpush1.bf16.msra.mxu0 %v1869
    %1969 = vmatprep.subr.bf16.mxu0 0
    %1970 = vmatpush1.bf16.msra.mxu0 %v1870
    %1971 = vmatprep.subr.bf16.mxu0 0
    %1972 = vmatpush1.bf16.msra.mxu0 %v1871
    %1973 = vmatprep.subr.bf16.mxu0 0
    %1974 = vmatpush1.bf16.msra.mxu0 %v1872
    %1975 = vmatprep.subr.bf16.mxu0 0
    %1976 = vmatpush1.bf16.msra.mxu0 %v1873
    %1977 = vmatprep.subr.bf16.mxu0 0
    %1978 = vmatpush1.bf16.msra.mxu0 %v1874
    %1979 = vmatprep.mubr.bf16.mxu0 %v1643
    %1980 = vmatmul.mubr.bf16.gmra.mrb[0].mxu0 %v1642
    %v1981 = vpop.f32.mrb[0].mxu0
    %v1982 = vadd.f32 %v1942, %v1981
    %v1983 = vpop.f32.mrb[0].mxu0
    %v1984 = vpop.f32.mrb[0].mxu0
    %v1985 = vpop.f32.mrb[0].mxu0
    %1986 = vdwg.mxu0
    %1987 = vmax.xlane.f32.xlu0 %v1982
    %v1988 = vpop.xlane.xlu0 %1987
    %v1989 = vsub.f32 %v1982, %v1988
    %v1990 = vmul.f32 %v1989, 1.442695
    %v1991 = vpow.pop %v1990
    %1992 = vadd.xlane.f32.xlu0 %v1991
    %v1993 = vpop.xlane.xlu0 %1992
    %v1994 = vrcp.pop %v1993
    %v1995 = vmul.f32 %v1991, %v1994
    %1996 = vst [vmem:[#allocation11] sm:$0xff] %v1995
    // Predicated region
    $region58: #{tpu_custom_call.1} parent=1 // pred_check
      _
    $region59: #{tpu_custom_call.1} parent=1 // pred_check_branch
      %1998 = sbr.rel (0) target = $region61
    $region60: #{tpu_custom_call.1} parent=1 // pred_region
      %s2000 = ssub.s32 128, 128
      %2001 = vsyncadd [#allocation4], %s2000
      %s2003 = sshll.u32 [#allocation11], 4
      %s2004 = int_to_ptr.vmem [resolvable:$true] %s2003
      %2006 = dma.vmem_to_hbm [thread:$0]  %s2004, 128, %s9, [#allocation4]
    $region61: #{tpu_custom_call.1} parent=1 // pred_fallthru
      _
    // Predicated region
    $region62: #{tpu_custom_call.1} parent=1 // pred_check
      _
    $region63: #{tpu_custom_call.1} parent=1 // pred_check_branch
      %2008 = sbr.rel (0) target = $region65
    $region64: #{tpu_custom_call.1} parent=1 // pred_region
      %2009 = dma.done [#allocation4], 128
    $region65: #{tpu_custom_call.1} parent=1 // pred_fallthru
      _
    %2010 = vsyncpa [#allocation3], 1
    %2011 = vsyncpa [#allocation6], 1
    %2012 = vsyncpa [#allocation9], 1
    %2013 = vsyncpa [#allocation4], 1

</llo_original>
